<compile_context>
chip_gen: v7x
topology: tpu7x:2x2x1
jax: 0.10.0
libtpu: 0.0.40
codegen_flags: <defaults>
</compile_context>

<pallas_src>
import functools
import math

import jax
import jax.numpy as jnp
from jax.experimental import pallas as pl
from jax.experimental.pallas import tpu as pltpu

LN_EPS = 1e-5


def _layernorm_onepass(x, g, b):
    """Kernel-side LayerNorm: one cross-lane pass (E[x^2] - mu^2)."""
    mu = jnp.mean(x, axis=-1, keepdims=True)
    ms = jnp.mean(x * x, axis=-1, keepdims=True)
    var = jnp.maximum(ms - mu * mu, 0.0)
    return (x - mu) * jax.lax.rsqrt(var + LN_EPS) * g + b


def _layernorm_ref(x, g, b):
    mu = jnp.mean(x, axis=-1, keepdims=True)
    var = jnp.mean((x - mu) ** 2, axis=-1, keepdims=True)
    return (x - mu) * jax.lax.rsqrt(var + LN_EPS) * g + b


# --------------------------------- kernel ---------------------------------

def _sab_kernel(x_ref, wq_ref, bq_ref, wk_ref, bk_ref, wv_ref, bv_ref,
                wo_ref, bo_ref, g0_ref, b0_ref, g1_ref, b1_ref, o_ref,
                *, num_heads, use_ln, compute_dtype):
    f32 = jnp.float32
    tb, n, _ = x_ref.shape
    dim_v = wq_ref.shape[1]
    ds = dim_v // num_heads
    scale = 1.0 / math.sqrt(dim_v)             # PyTorch divides by sqrt(dim_V)

    # x arrives already in the compute dtype; fold TB into M for big matmuls.
    x = x_ref[...].reshape(tb * n, x_ref.shape[2])          # (M, dim_in)

    # Sequence+batch-batched projections (one matmul each), f32 accumulation.
    q = jnp.dot(x, wq_ref[...], preferred_element_type=f32) + bq_ref[...]  # (M, dv)
    k = jnp.dot(x, wk_ref[...], preferred_element_type=f32) + bk_ref[...]
    v = jnp.dot(x, wv_ref[...], preferred_element_type=f32) + bv_ref[...]

    # Scale folded into Q in f32 before the cast; residual uses the unscaled q.
    q_s = (q * scale).astype(compute_dtype).reshape(tb, n, dim_v)
    k_c = k.astype(compute_dtype).reshape(tb, n, dim_v)
    v_c = v.astype(compute_dtype).reshape(tb, n, dim_v)

    heads = []
    for h in range(num_heads):                 # static unroll over heads (small)
        sl = slice(h * ds, (h + 1) * ds)
        # scores: contract the head dim, batched over the TB batch elements.
        s = jnp.einsum("bqd,bkd->bqk", q_s[:, :, sl], k_c[:, :, sl],
                       preferred_element_type=f32)           # (TB, N, N) f32
        s = s - jnp.max(s, axis=-1, keepdims=True)
        p = jnp.exp(s)
        l = jnp.sum(p, axis=-1, keepdims=True)               # (TB, N, 1) f32
        acc = jnp.einsum("bqk,bkd->bqd", p.astype(compute_dtype), v_c[:, :, sl],
                         preferred_element_type=f32)         # (TB, N, ds) f32
        if compute_dtype == jnp.float32:       # exact path: plain divide
            inv = 1.0 / l
        else:                                  # EUP reciprocal, normalize after PV
            inv = pl.reciprocal(l, approx=True)
        heads.append(acc * inv)

    attn = jnp.concatenate(heads, axis=-1).reshape(tb * n, dim_v)
    o = q + attn                               # residual once on the full (M, dv)

    if use_ln:
        o = _layernorm_onepass(o, g0_ref[...], b0_ref[...])

    ff = jnp.dot(o.astype(compute_dtype), wo_ref[...],
                 preferred_element_type=f32) + bo_ref[...]
    o = o + jnp.maximum(ff, 0.0)

    if use_ln:
        o = _layernorm_onepass(o, g1_ref[...], b1_ref[...])

    o_ref[...] = o.reshape(tb, n, dim_v).astype(o_ref.dtype)  # dense block store


# ------------------------------ wrapper ------------------------------

def _vmem_estimate(tb, n, dim_in, dim_v, cdt_bytes):
    """Rough per-step VMEM footprint (bytes), generous on intermediates."""
    rows = tb * n
    est = 0
    est += 2 * rows * dim_in * cdt_bytes                          # x block, 2x buffered
    est += 2 * rows * dim_v * 4                                   # out block, 2x buffered
    est += 2 * (3 * dim_in * dim_v + dim_v * dim_v) * cdt_bytes   # weights, 2x buffered
    est += 3 * rows * dim_v * (4 + cdt_bytes)                     # q/k/v f32 + casts
    est += 4 * tb * n * n * 4                                     # live (TB,N,N) score/prob
    est += 3 * rows * dim_v * 4                                   # attn / o / ff
    return est


def _pick_tb(b_sz, n, dim_in, dim_v, cdt_bytes,
             target_rows=512, vmem_budget=20 * 1024 * 1024):
    """Largest divisor of B meeting the row target and VMEM budget, preferring
    >= 2 grid steps (v7x has 2 TensorCores sharding the 'parallel' axis)."""
    divs = sorted((d for d in range(1, b_sz + 1) if b_sz % d == 0), reverse=True)

    def fits(d):
        return _vmem_estimate(d, n, dim_in, dim_v, cdt_bytes) <= vmem_budget

    tb = 1
    for d in divs:
        if d * n <= target_rows and fits(d):
            tb = d
            break
    if tb == b_sz and b_sz >= 2:
        for d in divs:
            if d < b_sz and fits(d) and (d * n >= 128 or d >= b_sz // 2):
                tb = d
                break
    return tb


def sab_forward(x, params, *, num_heads, ln=False, use_bf16=True, block_batch=None):
    """x: (B, N, dim_in) float32 -> (B, N, dim_V) float32."""
    b_sz, n_seq, dim_in = x.shape
    dim_v = params["wq"].shape[0]              # PyTorch nn.Linear weight is (out, in)
    assert dim_v % num_heads == 0
    cdt = jnp.bfloat16 if use_bf16 else jnp.float32
    cdt_bytes = 2 if use_bf16 else 4

    tb = block_batch if block_batch is not None else _pick_tb(
        b_sz, n_seq, dim_in, dim_v, cdt_bytes)
    assert b_sz % tb == 0, f"block_batch {tb} must divide batch {b_sz}"
    grid = (b_sz // tb,)

    def wmat(w):                               # (out, in) -> (in, out), compute dtype
        return jnp.transpose(w).astype(cdt)

    def vrow(v):                               # (out,) -> (1, out), f32
        return v.reshape(1, -1).astype(jnp.float32)

    wq, wk = wmat(params["wq"]), wmat(params["wk"])
    wv, wo = wmat(params["wv"]), wmat(params["wo"])
    bq, bk = vrow(params["bq"]), vrow(params["bk"])
    bv, bo = vrow(params["bv"]), vrow(params["bo"])
    if ln:
        g0, b0 = vrow(params["ln0_g"]), vrow(params["ln0_b"])
        g1, b1 = vrow(params["ln1_g"]), vrow(params["ln1_b"])
    else:
        g0 = b0 = g1 = b1 = jnp.zeros((1, dim_v), jnp.float32)   # unused refs

    def full(a):
        return pl.BlockSpec(a.shape, lambda i: (0,) * a.ndim)

    kernel = functools.partial(_sab_kernel, num_heads=num_heads,
                               use_ln=ln, compute_dtype=cdt)

    est = _vmem_estimate(tb, n_seq, dim_in, dim_v, cdt_bytes)
    vmem_limit = int(min(max(2 * est, 32 * 1024 * 1024), 48 * 1024 * 1024))

    return pl.pallas_call(
        kernel,
        grid=grid,
        in_specs=[pl.BlockSpec((tb, n_seq, dim_in), lambda i: (i, 0, 0)),
                  full(wq), full(bq), full(wk), full(bk),
                  full(wv), full(bv), full(wo), full(bo),
                  full(g0), full(b0), full(g1), full(b1)],
        out_specs=pl.BlockSpec((tb, n_seq, dim_v), lambda i: (i, 0, 0)),
        out_shape=jax.ShapeDtypeStruct((b_sz, n_seq, dim_v), jnp.float32),
        compiler_params=pltpu.CompilerParams(
            dimension_semantics=("parallel",),
            vmem_limit_bytes=vmem_limit),
    )(x.astype(cdt), wq, bq, wk, bk, wv, bv, wo, bo, g0, b0, g1, b1)


# ------------------------- parameter init & reference -------------------------

def init_params(key, dim_in, dim_v):
    ks = jax.random.split(key, 12)

    def lin_init(kw, kb, fan_in, fan_out):
        lim = 1.0 / math.sqrt(fan_in)
        w = jax.random.uniform(kw, (fan_out, fan_in), jnp.float32, -lim, lim)
        b = jax.random.uniform(kb, (fan_out,), jnp.float32, -lim, lim)
        return w, b

    p = {}
    p["wq"], p["bq"] = lin_init(ks[0], ks[1], dim_in, dim_v)
    p["wk"], p["bk"] = lin_init(ks[2], ks[3], dim_in, dim_v)
    p["wv"], p["bv"] = lin_init(ks[4], ks[5], dim_in, dim_v)
    p["wo"], p["bo"] = lin_init(ks[6], ks[7], dim_v, dim_v)
    p["ln0_g"] = 1.0 + 0.05 * jax.random.normal(ks[8], (dim_v,), jnp.float32)
    p["ln0_b"] = 0.05 * jax.random.normal(ks[9], (dim_v,), jnp.float32)
    p["ln1_g"] = 1.0 + 0.05 * jax.random.normal(ks[10], (dim_v,), jnp.float32)
    p["ln1_b"] = 0.05 * jax.random.normal(ks[11], (dim_v,), jnp.float32)
    return p


def reference_sab(x, params, *, num_heads, ln=False):
    """Pure-JAX (non-Pallas) reference matching the PyTorch MAB/SAB forward."""
    hp = jax.lax.Precision.HIGHEST
    f32 = jnp.float32
    x = x.astype(f32)
    dim_v = params["wq"].shape[0]

    def lin(t, w, b):
        return jnp.einsum("bnd,od->bno", t, w.astype(f32), precision=hp) + b.astype(f32)

    q = lin(x, params["wq"], params["bq"])
    k = lin(x, params["wk"], params["bk"])
    v = lin(x, params["wv"], params["bv"])

    def split_heads(t):        # torch.cat(t.split(ds, 2), 0): (B,N,dv) -> (H*B,N,ds)
        return jnp.concatenate(jnp.split(t, num_heads, axis=2), axis=0)

    q_, k_, v_ = split_heads(q), split_heads(k), split_heads(v)
    a = jax.nn.softmax(
        jnp.einsum("bqd,bkd->bqk", q_, k_, precision=hp) / math.sqrt(dim_v), axis=2)
    o = q_ + jnp.einsum("bqk,bkd->bqd", a, v_, precision=hp)
    o = jnp.concatenate(jnp.split(o, num_heads, axis=0), axis=2)   # (B,N,dv)
    if ln:
        o = _layernorm_ref(o, params["ln0_g"], params["ln0_b"])
    o = o + jax.nn.relu(lin(o, params["wo"], params["bo"]))
    if ln:
        o = _layernorm_ref(o, params["ln1_g"], params["ln1_b"])
    return o


if __name__ == "__main__":
    batch, seq, dim_in, dim_v, heads = 2, 8, 16, 32, 4

    key = jax.random.PRNGKey(0)
    pkey, xkey = jax.random.split(key)
    params = init_params(pkey, dim_in, dim_v)
    x = jax.random.normal(xkey, (batch, seq, dim_in), jnp.float32)

    # (ln, use_bf16, block_batch): exercises both TB=1 (auto) and TB=2 (folded-batch)
    # grid layouts; f32 path checked tightly, bf16 paths in relative L2.
    configs = [
        (False, False, None),
        (False, True, None),
        (False, True, 2),
        (True, True, 2),
    ]
    for ln_flag, use_bf16, tb in configs:
        out = jax.block_until_ready(
            sab_forward(x, params, num_heads=heads, ln=ln_flag,
                        use_bf16=use_bf16, block_batch=tb))
        ref = jax.block_until_ready(
            reference_sab(x, params, num_heads=heads, ln=ln_flag))
        assert out.shape == (batch, seq, dim_v)
        assert bool(jnp.all(jnp.isfinite(out)))
        if use_bf16:
            rel = float(jnp.linalg.norm(out - ref) / jnp.linalg.norm(ref))
            assert rel < 2e-2, f"bf16 rel-L2 err {rel} (ln={ln_flag}, tb={tb})"
        else:
            err = float(jnp.max(jnp.abs(out - ref)))
            assert err < 2e-3, f"f32 max abs err {err} (ln={ln_flag}, tb={tb})"

    print("KERNEL_OK")
</pallas_src>

<mosaic_0001>
module attributes {stable_mosaic.version = 11 : i64} {
  func.func @_sab_kernel(%arg0: i32, %arg1: memref<1x8x16xf32, #tpu.memory_space<vmem>>, %arg2: memref<16x32xf32, #tpu.memory_space<vmem>>, %arg3: memref<1x32xf32, #tpu.memory_space<vmem>>, %arg4: memref<16x32xf32, #tpu.memory_space<vmem>>, %arg5: memref<1x32xf32, #tpu.memory_space<vmem>>, %arg6: memref<16x32xf32, #tpu.memory_space<vmem>>, %arg7: memref<1x32xf32, #tpu.memory_space<vmem>>, %arg8: memref<32x32xf32, #tpu.memory_space<vmem>>, %arg9: memref<1x32xf32, #tpu.memory_space<vmem>>, %arg10: memref<1x32xf32, #tpu.memory_space<vmem>>, %arg11: memref<1x32xf32, #tpu.memory_space<vmem>>, %arg12: memref<1x32xf32, #tpu.memory_space<vmem>>, %arg13: memref<1x32xf32, #tpu.memory_space<vmem>>, %arg14: memref<1x8x32xf32, #tpu.memory_space<vmem>>) attributes {dimension_semantics = [#tpu.dimension_semantics<parallel>], iteration_bounds = array<i64: 2>, scalar_prefetch = 0 : i64, scratch_operands = 0 : i64, tpu.core_type = #tpu.core_type<tc>, window_params = [{transform_indices = @transform_0, window_bounds = array<i64: 1, 8, 16>}, {pipeline_mode = #tpu.pipeline_mode<synchronous>, transform_indices = @transform_1, window_bounds = array<i64: 16, 32>}, {pipeline_mode = #tpu.pipeline_mode<synchronous>, transform_indices = @transform_2, window_bounds = array<i64: 1, 32>}, {pipeline_mode = #tpu.pipeline_mode<synchronous>, transform_indices = @transform_3, window_bounds = array<i64: 16, 32>}, {pipeline_mode = #tpu.pipeline_mode<synchronous>, transform_indices = @transform_4, window_bounds = array<i64: 1, 32>}, {pipeline_mode = #tpu.pipeline_mode<synchronous>, transform_indices = @transform_5, window_bounds = array<i64: 16, 32>}, {pipeline_mode = #tpu.pipeline_mode<synchronous>, transform_indices = @transform_6, window_bounds = array<i64: 1, 32>}, {pipeline_mode = #tpu.pipeline_mode<synchronous>, transform_indices = @transform_7, window_bounds = array<i64: 32, 32>}, {pipeline_mode = #tpu.pipeline_mode<synchronous>, transform_indices = @transform_8, window_bounds = array<i64: 1, 32>}, {pipeline_mode = #tpu.pipeline_mode<synchronous>, transform_indices = @transform_9, window_bounds = array<i64: 1, 32>}, {pipeline_mode = #tpu.pipeline_mode<synchronous>, transform_indices = @transform_10, window_bounds = array<i64: 1, 32>}, {pipeline_mode = #tpu.pipeline_mode<synchronous>, transform_indices = @transform_11, window_bounds = array<i64: 1, 32>}, {pipeline_mode = #tpu.pipeline_mode<synchronous>, transform_indices = @transform_12, window_bounds = array<i64: 1, 32>}, {transform_indices = @transform_13, window_bounds = array<i64: 1, 8, 32>}]} {
    %c0 = arith.constant 0 : index
    %c0_0 = arith.constant 0 : index
    %c0_1 = arith.constant 0 : index
    %0 = vector.load %arg1[%c0, %c0_0, %c0_1] : memref<1x8x16xf32, #tpu.memory_space<vmem>>, vector<1x8x16xf32>
    %1 = vector.shape_cast %0 : vector<1x8x16xf32> to vector<8x16xf32>
    %c0_2 = arith.constant 0 : index
    %c0_3 = arith.constant 0 : index
    %2 = vector.load %arg2[%c0_2, %c0_3] : memref<16x32xf32, #tpu.memory_space<vmem>>, vector<16x32xf32>
    %cst = arith.constant dense<0.000000e+00> : vector<8x32xf32>
    %3 = tpu.matmul %1, %2, %cst {dimension_numbers = #tpu.dot_dimension_numbers<[1], [0], [0], [1], [0, 0, 1, 1], [], []>} : vector<8x16xf32>, vector<16x32xf32>, vector<8x32xf32> -> vector<8x32xf32>
    %c0_4 = arith.constant 0 : index
    %c0_5 = arith.constant 0 : index
    %4 = vector.load %arg3[%c0_4, %c0_5] : memref<1x32xf32, #tpu.memory_space<vmem>>, vector<1x32xf32>
    %5 = vector.broadcast %4 : vector<1x32xf32> to vector<8x32xf32>
    %6 = arith.addf %3, %5 : vector<8x32xf32>
    %c0_6 = arith.constant 0 : index
    %c0_7 = arith.constant 0 : index
    %7 = vector.load %arg4[%c0_6, %c0_7] : memref<16x32xf32, #tpu.memory_space<vmem>>, vector<16x32xf32>
    %cst_8 = arith.constant dense<0.000000e+00> : vector<8x32xf32>
    %8 = tpu.matmul %1, %7, %cst_8 {dimension_numbers = #tpu.dot_dimension_numbers<[1], [0], [0], [1], [0, 0, 1, 1], [], []>} : vector<8x16xf32>, vector<16x32xf32>, vector<8x32xf32> -> vector<8x32xf32>
    %c0_9 = arith.constant 0 : index
    %c0_10 = arith.constant 0 : index
    %9 = vector.load %arg5[%c0_9, %c0_10] : memref<1x32xf32, #tpu.memory_space<vmem>>, vector<1x32xf32>
    %10 = vector.broadcast %9 : vector<1x32xf32> to vector<8x32xf32>
    %11 = arith.addf %8, %10 : vector<8x32xf32>
    %c0_11 = arith.constant 0 : index
    %c0_12 = arith.constant 0 : index
    %12 = vector.load %arg6[%c0_11, %c0_12] : memref<16x32xf32, #tpu.memory_space<vmem>>, vector<16x32xf32>
    %cst_13 = arith.constant dense<0.000000e+00> : vector<8x32xf32>
    %13 = tpu.matmul %1, %12, %cst_13 {dimension_numbers = #tpu.dot_dimension_numbers<[1], [0], [0], [1], [0, 0, 1, 1], [], []>} : vector<8x16xf32>, vector<16x32xf32>, vector<8x32xf32> -> vector<8x32xf32>
    %c0_14 = arith.constant 0 : index
    %c0_15 = arith.constant 0 : index
    %14 = vector.load %arg7[%c0_14, %c0_15] : memref<1x32xf32, #tpu.memory_space<vmem>>, vector<1x32xf32>
    %15 = vector.broadcast %14 : vector<1x32xf32> to vector<8x32xf32>
    %16 = arith.addf %13, %15 : vector<8x32xf32>
    %cst_16 = arith.constant 0.176776692 : f32
    %17 = vector.broadcast %cst_16 : f32 to vector<8x32xf32>
    %18 = arith.mulf %6, %17 : vector<8x32xf32>
    %19 = vector.shape_cast %18 : vector<8x32xf32> to vector<1x8x32xf32>
    %20 = vector.shape_cast %11 : vector<8x32xf32> to vector<1x8x32xf32>
    %21 = vector.shape_cast %16 : vector<8x32xf32> to vector<1x8x32xf32>
    %22 = vector.extract_strided_slice %19 {offsets = [0, 0, 0], sizes = [1, 8, 8], strides = [1, 1, 1]} : vector<1x8x32xf32> to vector<1x8x8xf32>
    %23 = vector.extract_strided_slice %20 {offsets = [0, 0, 0], sizes = [1, 8, 8], strides = [1, 1, 1]} : vector<1x8x32xf32> to vector<1x8x8xf32>
    "tpu.trace_start"() <{level = 10 : i32, message = "bqd,bkd->bqk"}> : () -> ()
    %cst_17 = arith.constant dense<0.000000e+00> : vector<1x8x8xf32>
    %24 = tpu.matmul %22, %23, %cst_17 {dimension_numbers = #tpu.dot_dimension_numbers<[2], [2], [1], [1], [0, 0, 0, 1, 1, 1], [0], [0]>} : vector<1x8x8xf32>, vector<1x8x8xf32>, vector<1x8x8xf32> -> vector<1x8x8xf32>
    "tpu.trace_stop"() : () -> ()
    %cst_18 = arith.constant dense<0xFF800000> : vector<1x8xf32>
    %25 = vector.multi_reduction <maximumf>, %24, %cst_18 [2] : vector<1x8x8xf32> to vector<1x8xf32>
    %26 = vector.shape_cast %25 : vector<1x8xf32> to vector<1x8x1xf32>
    %27 = vector.broadcast %26 : vector<1x8x1xf32> to vector<1x8x8xf32>
    %28 = arith.subf %24, %27 : vector<1x8x8xf32>
    %29 = math.exp %28 : vector<1x8x8xf32>
    %cst_19 = arith.constant dense<0.000000e+00> : vector<1x8xf32>
    %30 = vector.multi_reduction <add>, %29, %cst_19 [2] : vector<1x8x8xf32> to vector<1x8xf32>
    %31 = vector.shape_cast %30 : vector<1x8xf32> to vector<1x8x1xf32>
    %32 = vector.extract_strided_slice %21 {offsets = [0, 0, 0], sizes = [1, 8, 8], strides = [1, 1, 1]} : vector<1x8x32xf32> to vector<1x8x8xf32>
    "tpu.trace_start"() <{level = 10 : i32, message = "bqk,bkd->bqd"}> : () -> ()
    %cst_20 = arith.constant dense<0.000000e+00> : vector<1x8x8xf32>
    %33 = tpu.matmul %29, %32, %cst_20 {dimension_numbers = #tpu.dot_dimension_numbers<[2], [1], [1], [2], [0, 0, 0, 1, 1, 2], [0], [0]>} : vector<1x8x8xf32>, vector<1x8x8xf32>, vector<1x8x8xf32> -> vector<1x8x8xf32>
    "tpu.trace_stop"() : () -> ()
    %cst_21 = arith.constant 1.000000e+00 : f32
    %34 = vector.broadcast %cst_21 : f32 to vector<1x8x1xf32>
    %35 = arith.divf %34, %31 : vector<1x8x1xf32>
    %36 = vector.broadcast %35 : vector<1x8x1xf32> to vector<1x8x8xf32>
    %37 = arith.mulf %33, %36 : vector<1x8x8xf32>
    %38 = vector.extract_strided_slice %19 {offsets = [0, 0, 8], sizes = [1, 8, 8], strides = [1, 1, 1]} : vector<1x8x32xf32> to vector<1x8x8xf32>
    %39 = vector.extract_strided_slice %20 {offsets = [0, 0, 8], sizes = [1, 8, 8], strides = [1, 1, 1]} : vector<1x8x32xf32> to vector<1x8x8xf32>
    "tpu.trace_start"() <{level = 10 : i32, message = "bqd,bkd->bqk"}> : () -> ()
    %cst_22 = arith.constant dense<0.000000e+00> : vector<1x8x8xf32>
    %40 = tpu.matmul %38, %39, %cst_22 {dimension_numbers = #tpu.dot_dimension_numbers<[2], [2], [1], [1], [0, 0, 0, 1, 1, 1], [0], [0]>} : vector<1x8x8xf32>, vector<1x8x8xf32>, vector<1x8x8xf32> -> vector<1x8x8xf32>
    "tpu.trace_stop"() : () -> ()
    %cst_23 = arith.constant dense<0xFF800000> : vector<1x8xf32>
    %41 = vector.multi_reduction <maximumf>, %40, %cst_23 [2] : vector<1x8x8xf32> to vector<1x8xf32>
    %42 = vector.shape_cast %41 : vector<1x8xf32> to vector<1x8x1xf32>
    %43 = vector.broadcast %42 : vector<1x8x1xf32> to vector<1x8x8xf32>
    %44 = arith.subf %40, %43 : vector<1x8x8xf32>
    %45 = math.exp %44 : vector<1x8x8xf32>
    %cst_24 = arith.constant dense<0.000000e+00> : vector<1x8xf32>
    %46 = vector.multi_reduction <add>, %45, %cst_24 [2] : vector<1x8x8xf32> to vector<1x8xf32>
    %47 = vector.shape_cast %46 : vector<1x8xf32> to vector<1x8x1xf32>
    %48 = vector.extract_strided_slice %21 {offsets = [0, 0, 8], sizes = [1, 8, 8], strides = [1, 1, 1]} : vector<1x8x32xf32> to vector<1x8x8xf32>
    "tpu.trace_start"() <{level = 10 : i32, message = "bqk,bkd->bqd"}> : () -> ()
    %cst_25 = arith.constant dense<0.000000e+00> : vector<1x8x8xf32>
    %49 = tpu.matmul %45, %48, %cst_25 {dimension_numbers = #tpu.dot_dimension_numbers<[2], [1], [1], [2], [0, 0, 0, 1, 1, 2], [0], [0]>} : vector<1x8x8xf32>, vector<1x8x8xf32>, vector<1x8x8xf32> -> vector<1x8x8xf32>
    "tpu.trace_stop"() : () -> ()
    %cst_26 = arith.constant 1.000000e+00 : f32
    %50 = vector.broadcast %cst_26 : f32 to vector<1x8x1xf32>
    %51 = arith.divf %50, %47 : vector<1x8x1xf32>
    %52 = vector.broadcast %51 : vector<1x8x1xf32> to vector<1x8x8xf32>
    %53 = arith.mulf %49, %52 : vector<1x8x8xf32>
    %54 = vector.extract_strided_slice %19 {offsets = [0, 0, 16], sizes = [1, 8, 8], strides = [1, 1, 1]} : vector<1x8x32xf32> to vector<1x8x8xf32>
    %55 = vector.extract_strided_slice %20 {offsets = [0, 0, 16], sizes = [1, 8, 8], strides = [1, 1, 1]} : vector<1x8x32xf32> to vector<1x8x8xf32>
    "tpu.trace_start"() <{level = 10 : i32, message = "bqd,bkd->bqk"}> : () -> ()
    %cst_27 = arith.constant dense<0.000000e+00> : vector<1x8x8xf32>
    %56 = tpu.matmul %54, %55, %cst_27 {dimension_numbers = #tpu.dot_dimension_numbers<[2], [2], [1], [1], [0, 0, 0, 1, 1, 1], [0], [0]>} : vector<1x8x8xf32>, vector<1x8x8xf32>, vector<1x8x8xf32> -> vector<1x8x8xf32>
    "tpu.trace_stop"() : () -> ()
    %cst_28 = arith.constant dense<0xFF800000> : vector<1x8xf32>
    %57 = vector.multi_reduction <maximumf>, %56, %cst_28 [2] : vector<1x8x8xf32> to vector<1x8xf32>
    %58 = vector.shape_cast %57 : vector<1x8xf32> to vector<1x8x1xf32>
    %59 = vector.broadcast %58 : vector<1x8x1xf32> to vector<1x8x8xf32>
    %60 = arith.subf %56, %59 : vector<1x8x8xf32>
    %61 = math.exp %60 : vector<1x8x8xf32>
    %cst_29 = arith.constant dense<0.000000e+00> : vector<1x8xf32>
    %62 = vector.multi_reduction <add>, %61, %cst_29 [2] : vector<1x8x8xf32> to vector<1x8xf32>
    %63 = vector.shape_cast %62 : vector<1x8xf32> to vector<1x8x1xf32>
    %64 = vector.extract_strided_slice %21 {offsets = [0, 0, 16], sizes = [1, 8, 8], strides = [1, 1, 1]} : vector<1x8x32xf32> to vector<1x8x8xf32>
    "tpu.trace_start"() <{level = 10 : i32, message = "bqk,bkd->bqd"}> : () -> ()
    %cst_30 = arith.constant dense<0.000000e+00> : vector<1x8x8xf32>
    %65 = tpu.matmul %61, %64, %cst_30 {dimension_numbers = #tpu.dot_dimension_numbers<[2], [1], [1], [2], [0, 0, 0, 1, 1, 2], [0], [0]>} : vector<1x8x8xf32>, vector<1x8x8xf32>, vector<1x8x8xf32> -> vector<1x8x8xf32>
    "tpu.trace_stop"() : () -> ()
    %cst_31 = arith.constant 1.000000e+00 : f32
    %66 = vector.broadcast %cst_31 : f32 to vector<1x8x1xf32>
    %67 = arith.divf %66, %63 : vector<1x8x1xf32>
    %68 = vector.broadcast %67 : vector<1x8x1xf32> to vector<1x8x8xf32>
    %69 = arith.mulf %65, %68 : vector<1x8x8xf32>
    %70 = vector.extract_strided_slice %19 {offsets = [0, 0, 24], sizes = [1, 8, 8], strides = [1, 1, 1]} : vector<1x8x32xf32> to vector<1x8x8xf32>
    %71 = vector.extract_strided_slice %20 {offsets = [0, 0, 24], sizes = [1, 8, 8], strides = [1, 1, 1]} : vector<1x8x32xf32> to vector<1x8x8xf32>
    "tpu.trace_start"() <{level = 10 : i32, message = "bqd,bkd->bqk"}> : () -> ()
    %cst_32 = arith.constant dense<0.000000e+00> : vector<1x8x8xf32>
    %72 = tpu.matmul %70, %71, %cst_32 {dimension_numbers = #tpu.dot_dimension_numbers<[2], [2], [1], [1], [0, 0, 0, 1, 1, 1], [0], [0]>} : vector<1x8x8xf32>, vector<1x8x8xf32>, vector<1x8x8xf32> -> vector<1x8x8xf32>
    "tpu.trace_stop"() : () -> ()
    %cst_33 = arith.constant dense<0xFF800000> : vector<1x8xf32>
    %73 = vector.multi_reduction <maximumf>, %72, %cst_33 [2] : vector<1x8x8xf32> to vector<1x8xf32>
    %74 = vector.shape_cast %73 : vector<1x8xf32> to vector<1x8x1xf32>
    %75 = vector.broadcast %74 : vector<1x8x1xf32> to vector<1x8x8xf32>
    %76 = arith.subf %72, %75 : vector<1x8x8xf32>
    %77 = math.exp %76 : vector<1x8x8xf32>
    %cst_34 = arith.constant dense<0.000000e+00> : vector<1x8xf32>
    %78 = vector.multi_reduction <add>, %77, %cst_34 [2] : vector<1x8x8xf32> to vector<1x8xf32>
    %79 = vector.shape_cast %78 : vector<1x8xf32> to vector<1x8x1xf32>
    %80 = vector.extract_strided_slice %21 {offsets = [0, 0, 24], sizes = [1, 8, 8], strides = [1, 1, 1]} : vector<1x8x32xf32> to vector<1x8x8xf32>
    "tpu.trace_start"() <{level = 10 : i32, message = "bqk,bkd->bqd"}> : () -> ()
    %cst_35 = arith.constant dense<0.000000e+00> : vector<1x8x8xf32>
    %81 = tpu.matmul %77, %80, %cst_35 {dimension_numbers = #tpu.dot_dimension_numbers<[2], [1], [1], [2], [0, 0, 0, 1, 1, 2], [0], [0]>} : vector<1x8x8xf32>, vector<1x8x8xf32>, vector<1x8x8xf32> -> vector<1x8x8xf32>
    "tpu.trace_stop"() : () -> ()
    %cst_36 = arith.constant 1.000000e+00 : f32
    %82 = vector.broadcast %cst_36 : f32 to vector<1x8x1xf32>
    %83 = arith.divf %82, %79 : vector<1x8x1xf32>
    %84 = vector.broadcast %83 : vector<1x8x1xf32> to vector<1x8x8xf32>
    %85 = arith.mulf %81, %84 : vector<1x8x8xf32>
    %86 = tpu.concatenate %37, %53, %69, %85 in 2 : vector<1x8x8xf32>, vector<1x8x8xf32>, vector<1x8x8xf32>, vector<1x8x8xf32> -> vector<1x8x32xf32>
    %87 = vector.shape_cast %86 : vector<1x8x32xf32> to vector<8x32xf32>
    %88 = arith.addf %6, %87 : vector<8x32xf32>
    %c0_37 = arith.constant 0 : index
    %c0_38 = arith.constant 0 : index
    %89 = vector.load %arg8[%c0_37, %c0_38] : memref<32x32xf32, #tpu.memory_space<vmem>>, vector<32x32xf32>
    %cst_39 = arith.constant dense<0.000000e+00> : vector<8x32xf32>
    %90 = tpu.matmul %88, %89, %cst_39 {dimension_numbers = #tpu.dot_dimension_numbers<[1], [0], [0], [1], [0, 0, 1, 1], [], []>} : vector<8x32xf32>, vector<32x32xf32>, vector<8x32xf32> -> vector<8x32xf32>
    %c0_40 = arith.constant 0 : index
    %c0_41 = arith.constant 0 : index
    %91 = vector.load %arg9[%c0_40, %c0_41] : memref<1x32xf32, #tpu.memory_space<vmem>>, vector<1x32xf32>
    %92 = vector.broadcast %91 : vector<1x32xf32> to vector<8x32xf32>
    %93 = arith.addf %90, %92 : vector<8x32xf32>
    %cst_42 = arith.constant 0.000000e+00 : f32
    %94 = vector.broadcast %cst_42 : f32 to vector<8x32xf32>
    %95 = arith.maximumf %93, %94 : vector<8x32xf32>
    %96 = arith.addf %88, %95 : vector<8x32xf32>
    %97 = vector.shape_cast %96 : vector<8x32xf32> to vector<1x8x32xf32>
    %c0_43 = arith.constant 0 : index
    %c0_44 = arith.constant 0 : index
    %c0_45 = arith.constant 0 : index
    %98 = vector.load %arg14[%c0_43, %c0_44, %c0_45] : memref<1x8x32xf32, #tpu.memory_space<vmem>>, vector<1x8x32xf32>
    tpu.vector_store %arg14[%c0_43, %c0_44, %c0_45], %97 {strides = array<i32>} : memref<1x8x32xf32, #tpu.memory_space<vmem>>, vector<1x8x32xf32>,
    return
  }
  func.func @transform_0(%arg0: i32) -> (i32, i32, i32) {
    %c0_i32 = arith.constant 0 : i32
    %c0_i32_0 = arith.constant 0 : i32
    %c0_i32_1 = arith.constant 0 : i32
    return %arg0, %c0_i32, %c0_i32_0 : i32, i32, i32
  }
  func.func @transform_1(%arg0: i32) -> (i32, i32) {
    %c0_i32 = arith.constant 0 : i32
    %c0_i32_0 = arith.constant 0 : i32
    %c0_i32_1 = arith.constant 0 : i32
    return %c0_i32, %c0_i32_0 : i32, i32
  }
  func.func @transform_2(%arg0: i32) -> (i32, i32) {
    %c0_i32 = arith.constant 0 : i32
    %c0_i32_0 = arith.constant 0 : i32
    %c0_i32_1 = arith.constant 0 : i32
    return %c0_i32, %c0_i32_0 : i32, i32
  }
  func.func @transform_3(%arg0: i32) -> (i32, i32) {
    %c0_i32 = arith.constant 0 : i32
    %c0_i32_0 = arith.constant 0 : i32
    %c0_i32_1 = arith.constant 0 : i32
    return %c0_i32, %c0_i32_0 : i32, i32
  }
  func.func @transform_4(%arg0: i32) -> (i32, i32) {
    %c0_i32 = arith.constant 0 : i32
    %c0_i32_0 = arith.constant 0 : i32
    %c0_i32_1 = arith.constant 0 : i32
    return %c0_i32, %c0_i32_0 : i32, i32
  }
  func.func @transform_5(%arg0: i32) -> (i32, i32) {
    %c0_i32 = arith.constant 0 : i32
    %c0_i32_0 = arith.constant 0 : i32
    %c0_i32_1 = arith.constant 0 : i32
    return %c0_i32, %c0_i32_0 : i32, i32
  }
  func.func @transform_6(%arg0: i32) -> (i32, i32) {
    %c0_i32 = arith.constant 0 : i32
    %c0_i32_0 = arith.constant 0 : i32
    %c0_i32_1 = arith.constant 0 : i32
    return %c0_i32, %c0_i32_0 : i32, i32
  }
  func.func @transform_7(%arg0: i32) -> (i32, i32) {
    %c0_i32 = arith.constant 0 : i32
    %c0_i32_0 = arith.constant 0 : i32
    %c0_i32_1 = arith.constant 0 : i32
    return %c0_i32, %c0_i32_0 : i32, i32
  }
  func.func @transform_8(%arg0: i32) -> (i32, i32) {
    %c0_i32 = arith.constant 0 : i32
    %c0_i32_0 = arith.constant 0 : i32
    %c0_i32_1 = arith.constant 0 : i32
    return %c0_i32, %c0_i32_0 : i32, i32
  }
  func.func @transform_9(%arg0: i32) -> (i32, i32) {
    %c0_i32 = arith.constant 0 : i32
    %c0_i32_0 = arith.constant 0 : i32
    %c0_i32_1 = arith.constant 0 : i32
    return %c0_i32, %c0_i32_0 : i32, i32
  }
  func.func @transform_10(%arg0: i32) -> (i32, i32) {
    %c0_i32 = arith.constant 0 : i32
    %c0_i32_0 = arith.constant 0 : i32
    %c0_i32_1 = arith.constant 0 : i32
    return %c0_i32, %c0_i32_0 : i32, i32
  }
  func.func @transform_11(%arg0: i32) -> (i32, i32) {
    %c0_i32 = arith.constant 0 : i32
    %c0_i32_0 = arith.constant 0 : i32
    %c0_i32_1 = arith.constant 0 : i32
    return %c0_i32, %c0_i32_0 : i32, i32
  }
  func.func @transform_12(%arg0: i32) -> (i32, i32) {
    %c0_i32 = arith.constant 0 : i32
    %c0_i32_0 = arith.constant 0 : i32
    %c0_i32_1 = arith.constant 0 : i32
    return %c0_i32, %c0_i32_0 : i32, i32
  }
  func.func @transform_13(%arg0: i32) -> (i32, i32, i32) {
    %c0_i32 = arith.constant 0 : i32
    %c0_i32_0 = arith.constant 0 : i32
    %c0_i32_1 = arith.constant 0 : i32
    return %arg0, %c0_i32, %c0_i32_0 : i32, i32, i32
  }
}

</mosaic_0001>

<llo_original>
// kernel: tpu_custom_call.1
$region0: #{tpu_custom_call.1}
  #allocation0 [shape = 'u32[]', space=smem, size = 0x4, offset = 0x4, fixed_abs, tag = 'smem constant byte address 0x4 - core index']
  #allocation1 [shape = 'u32[144,128]{1,0:T(1,128)}', space=vmem, size = 0x12000, scoped, tag = 'internal scratch']
  %s0 = inlined_call_operand.hbm [shape: f32[2,8,16], index: 0, kind: input, shape index: {}]
  %s1 = inlined_call_operand.hbm [shape: f32[16,32], index: 1, kind: input, shape index: {}]
  %s2 = inlined_call_operand.vmem [shape: f32[1,32], index: 2, kind: input, shape index: {}]
  %s3 = inlined_call_operand.hbm [shape: f32[16,32], index: 3, kind: input, shape index: {}]
  %s4 = inlined_call_operand.vmem [shape: f32[1,32], index: 4, kind: input, shape index: {}]
  %s5 = inlined_call_operand.vmem [shape: f32[16,32], index: 5, kind: input, shape index: {}]
  %s6 = inlined_call_operand.vmem [shape: f32[1,32], index: 6, kind: input, shape index: {}]
  %s7 = inlined_call_operand.hbm [shape: f32[32,32], index: 7, kind: input, shape index: {}]
  %s8 = inlined_call_operand.vmem [shape: f32[1,32], index: 8, kind: input, shape index: {}]
  %s9 = inlined_call_operand.vmem [shape: f32[1,32], index: 9, kind: input, shape index: {}]
  %s10 = inlined_call_operand.vmem [shape: f32[1,32], index: 10, kind: input, shape index: {}]
  %s11 = inlined_call_operand.vmem [shape: f32[1,32], index: 11, kind: input, shape index: {}]
  %s12 = inlined_call_operand.vmem [shape: f32[1,32], index: 12, kind: input, shape index: {}]
  %s13 = inlined_call_operand.hbm [shape: f32[2,8,32], index: 13, kind: output, shape index: {}]
  %s14 = sld [smem:[#allocation0]]
  $region101: #{tpu_custom_call.1} parent=0
    _
  %s16 = ssub.s32 1, %s14
  %s17 = scalar_select 0, %s16, %s14
  $region1: #{tpu_custom_call.1} parent=0
    #allocation2 [shape = 'u8[8192]{0}', space=vmem, size = 0x2000, scoped, tag = 'input window, operand 0']
    #allocation3 [shape = 's32[2]{0}', space=sflag, size = 0x8, scoped, tag = 'scoped memory for tpu_custom_call.1']
    #allocation4 [shape = 's32[2]{0}', space=sflag, size = 0x8, scoped, tag = 'scoped memory for tpu_custom_call.1']
    #allocation5 [shape = 'u8[8192]{0}', space=vmem, size = 0x2000, scoped, tag = 'input window, operand 1, single buffered']
    #allocation6 [shape = 's32[1]{0}', space=sflag, size = 0x4, scoped, tag = 'scoped memory for tpu_custom_call.1']
    #allocation7 [shape = 'u8[8192]{0}', space=vmem, size = 0x2000, scoped, tag = 'input window, operand 3, single buffered']
    #allocation8 [shape = 'u8[16384]{0}', space=vmem, size = 0x4000, scoped, tag = 'input window, operand 7, single buffered']
    #allocation9 [shape = 's32[1]{0}', space=sflag, size = 0x4, scoped, tag = 'scoped memory for tpu_custom_call.1']
    #allocation10 [shape = 'u8[8192]{0}', space=vmem, size = 0x2000, scoped, tag = 'output window, operand 0']
    %18 = vsyncpa [#allocation3], 0
    %s19 = scalar_lea.sflag [#allocation3], 1
    %20 = vsyncpa %s19, 0
    %21 = vsyncpa [#allocation6], 0
    %22 = vsyncpa [#allocation9], 0
    %23 = vsyncpa [#allocation4], 0
    %s24 = scalar_lea.sflag [#allocation4], 1
    %25 = vsyncpa %s24, 0
    loop: start=0, step=1, limit=4
    $region2: #{tpu_custom_call.1} parent=1 // loop_pre_header
      _
    $region3: #{tpu_custom_call.1} parent=1 // loop_header
      %s27 = sphi 0, %s31
      %p28 = scmp.ge.s32.totalorder %s27, 4
      %s37 = sphi 0, %s39
      %s40 = sphi 0, %s37
      %s41 = sphi 0, %s40
      %s57 = sphi 0, %s41
      %s61 = sphi 0, %s61
      %s63 = sphi 0, %s61
      %s64 = sphi 0, %s63
      %s78 = sphi 0, %s64
      %s82 = sphi 0, %s82
      %s84 = sphi 0, %s82
      %s85 = sphi 0, %s84
      %s99 = sphi 0, %s85
      %s103 = sphi 0, %s103
      %s105 = sphi 0, %s103
      %s106 = sphi 0, %s105
      %s120 = sphi 0, %s106
      %s124 = sphi 0, %s124
      %s126 = sphi 0, %s124
      %s127 = sphi 0, %s126
      %s141 = sphi 0, %s127
      %s145 = sphi 0, %s145
      %s147 = sphi 0, %s145
      %s148 = sphi 0, %s147
      %s162 = sphi 0, %s148
      %s166 = sphi 0, %s166
      %s168 = sphi 0, %s166
      %s169 = sphi 0, %s168
      %s183 = sphi 0, %s169
      %s187 = sphi 0, %s187
      %s189 = sphi 0, %s187
      %s190 = sphi 0, %s189
      %s204 = sphi 0, %s190
      %s208 = sphi 0, %s208
      %s210 = sphi 0, %s208
      %s211 = sphi 0, %s210
      %s225 = sphi 0, %s211
      %s229 = sphi 0, %s229
      %s231 = sphi 0, %s229
      %s232 = sphi 0, %s231
      %s246 = sphi 0, %s232
      %s250 = sphi 0, %s250
      %s252 = sphi 0, %s250
      %s253 = sphi 0, %s252
      %s267 = sphi 0, %s253
      %s271 = sphi 0, %s271
      %s273 = sphi 0, %s271
      %s274 = sphi 0, %s273
      %s288 = sphi 0, %s274
      %s292 = sphi 0, %s292
      %s294 = sphi 0, %s292
      %s295 = sphi 0, %s294
      %s309 = sphi 0, %s295
      %s315 = sphi 0, %s317
      %s318 = sphi 0, %s315
      %s319 = sphi 0, %s318
      %s335 = sphi 0, %s319
    $region4: #{tpu_custom_call.1} parent=1 // loop_header_branch
      %30 = sbr.rel (%p28) target = $region8
    $region5: #{tpu_custom_call.1} parent=1 // loop_body
      %s32 = ssub.s32 %s27, 1
      %s33 = ssub.s32 %s27, 2
      %s34 = sadd.s32 %s27, 1
      %s35 = ssub.s32 %s27, %s34
      %p36 = scmp.eq.s32.totalorder %s35, 0
      %s38 = sadd.s32 %s37, 1
      %s39 = scalar_select %p36, %s37, %s38
      %p42 = pneg %p36
      %p43 = scmp.eq.s32.totalorder %s27, 1
      %p44 = por %p42, %p43
      %p45 = scmp.ne.s32.totalorder %s37, %s40
      %p46 = scmp.eq.s32.totalorder %s27, 0
      %p47 = por %p45, %p46
      %p48 = scmp.ne.s32.totalorder %s37, %s40
      %p49 = scmp.eq.s32.totalorder %s32, 1
      %p50 = por %p48, %p49
      %p51 = scmp.ne.s32.totalorder %s40, %s41
      %p52 = scmp.eq.s32.totalorder %s32, 0
      %p53 = por %p51, %p52
      %p54 = scmp.ne.s32.totalorder %s40, %s41
      %p55 = scmp.eq.s32.totalorder %s33, 1
      %p56 = por %p54, %p55
      %p58 = scmp.ne.s32.totalorder %s41, %s57
      %p59 = scmp.eq.s32.totalorder %s33, 0
      %p60 = por %p58, %p59
      %s62 = sadd.s32 %s61, 1
      %p65 = scmp.eq.s32.totalorder %s27, 1
      %p66 = scmp.ne.s32.totalorder %s61, %s63
      %p67 = scmp.eq.s32.totalorder %s27, 0
      %p68 = por %p66, %p67
      %p69 = scmp.ne.s32.totalorder %s61, %s63
      %p70 = scmp.eq.s32.totalorder %s32, 1
      %p71 = por %p69, %p70
      %p72 = scmp.ne.s32.totalorder %s63, %s64
      %p73 = scmp.eq.s32.totalorder %s32, 0
      %p74 = por %p72, %p73
      %p75 = scmp.ne.s32.totalorder %s63, %s64
      %p76 = scmp.eq.s32.totalorder %s33, 1
      %p77 = por %p75, %p76
      %p79 = scmp.ne.s32.totalorder %s64, %s78
      %p80 = scmp.eq.s32.totalorder %s33, 0
      %p81 = por %p79, %p80
      %s83 = sadd.s32 %s82, 1
      %p86 = scmp.eq.s32.totalorder %s27, 1
      %p87 = scmp.ne.s32.totalorder %s82, %s84
      %p88 = scmp.eq.s32.totalorder %s27, 0
      %p89 = por %p87, %p88
      %p90 = scmp.ne.s32.totalorder %s82, %s84
      %p91 = scmp.eq.s32.totalorder %s32, 1
      %p92 = por %p90, %p91
      %p93 = scmp.ne.s32.totalorder %s84, %s85
      %p94 = scmp.eq.s32.totalorder %s32, 0
      %p95 = por %p93, %p94
      %p96 = scmp.ne.s32.totalorder %s84, %s85
      %p97 = scmp.eq.s32.totalorder %s33, 1
      %p98 = por %p96, %p97
      %p100 = scmp.ne.s32.totalorder %s85, %s99
      %p101 = scmp.eq.s32.totalorder %s33, 0
      %p102 = por %p100, %p101
      %s104 = sadd.s32 %s103, 1
      %p107 = scmp.eq.s32.totalorder %s27, 1
      %p108 = scmp.ne.s32.totalorder %s103, %s105
      %p109 = scmp.eq.s32.totalorder %s27, 0
      %p110 = por %p108, %p109
      %p111 = scmp.ne.s32.totalorder %s103, %s105
      %p112 = scmp.eq.s32.totalorder %s32, 1
      %p113 = por %p111, %p112
      %p114 = scmp.ne.s32.totalorder %s105, %s106
      %p115 = scmp.eq.s32.totalorder %s32, 0
      %p116 = por %p114, %p115
      %p117 = scmp.ne.s32.totalorder %s105, %s106
      %p118 = scmp.eq.s32.totalorder %s33, 1
      %p119 = por %p117, %p118
      %p121 = scmp.ne.s32.totalorder %s106, %s120
      %p122 = scmp.eq.s32.totalorder %s33, 0
      %p123 = por %p121, %p122
      %s125 = sadd.s32 %s124, 1
      %p128 = scmp.eq.s32.totalorder %s27, 1
      %p129 = scmp.ne.s32.totalorder %s124, %s126
      %p130 = scmp.eq.s32.totalorder %s27, 0
      %p131 = por %p129, %p130
      %p132 = scmp.ne.s32.totalorder %s124, %s126
      %p133 = scmp.eq.s32.totalorder %s32, 1
      %p134 = por %p132, %p133
      %p135 = scmp.ne.s32.totalorder %s126, %s127
      %p136 = scmp.eq.s32.totalorder %s32, 0
      %p137 = por %p135, %p136
      %p138 = scmp.ne.s32.totalorder %s126, %s127
      %p139 = scmp.eq.s32.totalorder %s33, 1
      %p140 = por %p138, %p139
      %p142 = scmp.ne.s32.totalorder %s127, %s141
      %p143 = scmp.eq.s32.totalorder %s33, 0
      %p144 = por %p142, %p143
      %s146 = sadd.s32 %s145, 1
      %p149 = scmp.eq.s32.totalorder %s27, 1
      %p150 = scmp.ne.s32.totalorder %s145, %s147
      %p151 = scmp.eq.s32.totalorder %s27, 0
      %p152 = por %p150, %p151
      %p153 = scmp.ne.s32.totalorder %s145, %s147
      %p154 = scmp.eq.s32.totalorder %s32, 1
      %p155 = por %p153, %p154
      %p156 = scmp.ne.s32.totalorder %s147, %s148
      %p157 = scmp.eq.s32.totalorder %s32, 0
      %p158 = por %p156, %p157
      %p159 = scmp.ne.s32.totalorder %s147, %s148
      %p160 = scmp.eq.s32.totalorder %s33, 1
      %p161 = por %p159, %p160
      %p163 = scmp.ne.s32.totalorder %s148, %s162
      %p164 = scmp.eq.s32.totalorder %s33, 0
      %p165 = por %p163, %p164
      %s167 = sadd.s32 %s166, 1
      %p170 = scmp.eq.s32.totalorder %s27, 1
      %p171 = scmp.ne.s32.totalorder %s166, %s168
      %p172 = scmp.eq.s32.totalorder %s27, 0
      %p173 = por %p171, %p172
      %p174 = scmp.ne.s32.totalorder %s166, %s168
      %p175 = scmp.eq.s32.totalorder %s32, 1
      %p176 = por %p174, %p175
      %p177 = scmp.ne.s32.totalorder %s168, %s169
      %p178 = scmp.eq.s32.totalorder %s32, 0
      %p179 = por %p177, %p178
      %p180 = scmp.ne.s32.totalorder %s168, %s169
      %p181 = scmp.eq.s32.totalorder %s33, 1
      %p182 = por %p180, %p181
      %p184 = scmp.ne.s32.totalorder %s169, %s183
      %p185 = scmp.eq.s32.totalorder %s33, 0
      %p186 = por %p184, %p185
      %s188 = sadd.s32 %s187, 1
      %p191 = scmp.eq.s32.totalorder %s27, 1
      %p192 = scmp.ne.s32.totalorder %s187, %s189
      %p193 = scmp.eq.s32.totalorder %s27, 0
      %p194 = por %p192, %p193
      %p195 = scmp.ne.s32.totalorder %s187, %s189
      %p196 = scmp.eq.s32.totalorder %s32, 1
      %p197 = por %p195, %p196
      %p198 = scmp.ne.s32.totalorder %s189, %s190
      %p199 = scmp.eq.s32.totalorder %s32, 0
      %p200 = por %p198, %p199
      %p201 = scmp.ne.s32.totalorder %s189, %s190
      %p202 = scmp.eq.s32.totalorder %s33, 1
      %p203 = por %p201, %p202
      %p205 = scmp.ne.s32.totalorder %s190, %s204
      %p206 = scmp.eq.s32.totalorder %s33, 0
      %p207 = por %p205, %p206
      %s209 = sadd.s32 %s208, 1
      %p212 = scmp.eq.s32.totalorder %s27, 1
      %p213 = scmp.ne.s32.totalorder %s208, %s210
      %p214 = scmp.eq.s32.totalorder %s27, 0
      %p215 = por %p213, %p214
      %p216 = scmp.ne.s32.totalorder %s208, %s210
      %p217 = scmp.eq.s32.totalorder %s32, 1
      %p218 = por %p216, %p217
      %p219 = scmp.ne.s32.totalorder %s210, %s211
      %p220 = scmp.eq.s32.totalorder %s32, 0
      %p221 = por %p219, %p220
      %p222 = scmp.ne.s32.totalorder %s210, %s211
      %p223 = scmp.eq.s32.totalorder %s33, 1
      %p224 = por %p222, %p223
      %p226 = scmp.ne.s32.totalorder %s211, %s225
      %p227 = scmp.eq.s32.totalorder %s33, 0
      %p228 = por %p226, %p227
      %s230 = sadd.s32 %s229, 1
      %p233 = scmp.eq.s32.totalorder %s27, 1
      %p234 = scmp.ne.s32.totalorder %s229, %s231
      %p235 = scmp.eq.s32.totalorder %s27, 0
      %p236 = por %p234, %p235
      %p237 = scmp.ne.s32.totalorder %s229, %s231
      %p238 = scmp.eq.s32.totalorder %s32, 1
      %p239 = por %p237, %p238
      %p240 = scmp.ne.s32.totalorder %s231, %s232
      %p241 = scmp.eq.s32.totalorder %s32, 0
      %p242 = por %p240, %p241
      %p243 = scmp.ne.s32.totalorder %s231, %s232
      %p244 = scmp.eq.s32.totalorder %s33, 1
      %p245 = por %p243, %p244
      %p247 = scmp.ne.s32.totalorder %s232, %s246
      %p248 = scmp.eq.s32.totalorder %s33, 0
      %p249 = por %p247, %p248
      %s251 = sadd.s32 %s250, 1
      %p254 = scmp.eq.s32.totalorder %s27, 1
      %p255 = scmp.ne.s32.totalorder %s250, %s252
      %p256 = scmp.eq.s32.totalorder %s27, 0
      %p257 = por %p255, %p256
      %p258 = scmp.ne.s32.totalorder %s250, %s252
      %p259 = scmp.eq.s32.totalorder %s32, 1
      %p260 = por %p258, %p259
      %p261 = scmp.ne.s32.totalorder %s252, %s253
      %p262 = scmp.eq.s32.totalorder %s32, 0
      %p263 = por %p261, %p262
      %p264 = scmp.ne.s32.totalorder %s252, %s253
      %p265 = scmp.eq.s32.totalorder %s33, 1
      %p266 = por %p264, %p265
      %p268 = scmp.ne.s32.totalorder %s253, %s267
      %p269 = scmp.eq.s32.totalorder %s33, 0
      %p270 = por %p268, %p269
      %s272 = sadd.s32 %s271, 1
      %p275 = scmp.eq.s32.totalorder %s27, 1
      %p276 = scmp.ne.s32.totalorder %s271, %s273
      %p277 = scmp.eq.s32.totalorder %s27, 0
      %p278 = por %p276, %p277
      %p279 = scmp.ne.s32.totalorder %s271, %s273
      %p280 = scmp.eq.s32.totalorder %s32, 1
      %p281 = por %p279, %p280
      %p282 = scmp.ne.s32.totalorder %s273, %s274
      %p283 = scmp.eq.s32.totalorder %s32, 0
      %p284 = por %p282, %p283
      %p285 = scmp.ne.s32.totalorder %s273, %s274
      %p286 = scmp.eq.s32.totalorder %s33, 1
      %p287 = por %p285, %p286
      %p289 = scmp.ne.s32.totalorder %s274, %s288
      %p290 = scmp.eq.s32.totalorder %s33, 0
      %p291 = por %p289, %p290
      %s293 = sadd.s32 %s292, 1
      %p296 = scmp.eq.s32.totalorder %s27, 1
      %p297 = scmp.ne.s32.totalorder %s292, %s294
      %p298 = scmp.eq.s32.totalorder %s27, 0
      %p299 = por %p297, %p298
      %p300 = scmp.ne.s32.totalorder %s292, %s294
      %p301 = scmp.eq.s32.totalorder %s32, 1
      %p302 = por %p300, %p301
      %p303 = scmp.ne.s32.totalorder %s294, %s295
      %p304 = scmp.eq.s32.totalorder %s32, 0
      %p305 = por %p303, %p304
      %p306 = scmp.ne.s32.totalorder %s294, %s295
      %p307 = scmp.eq.s32.totalorder %s33, 1
      %p308 = por %p306, %p307
      %p310 = scmp.ne.s32.totalorder %s295, %s309
      %p311 = scmp.eq.s32.totalorder %s33, 0
      %p312 = por %p310, %p311
      %s313 = ssub.s32 %s27, %s34
      %p314 = scmp.eq.s32.totalorder %s313, 0
      %s316 = sadd.s32 %s315, 1
      %s317 = scalar_select %p314, %s315, %s316
      %p320 = pneg %p314
      %p321 = scmp.eq.s32.totalorder %s27, 1
      %p322 = por %p320, %p321
      %p323 = scmp.ne.s32.totalorder %s315, %s318
      %p324 = scmp.eq.s32.totalorder %s27, 0
      %p325 = por %p323, %p324
      %p326 = scmp.ne.s32.totalorder %s315, %s318
      %p327 = scmp.eq.s32.totalorder %s32, 1
      %p328 = por %p326, %p327
      %p329 = scmp.ne.s32.totalorder %s318, %s319
      %p330 = scmp.eq.s32.totalorder %s32, 0
      %p331 = por %p329, %p330
      %p332 = scmp.ne.s32.totalorder %s318, %s319
      %p333 = scmp.eq.s32.totalorder %s33, 1
      %p334 = por %p332, %p333
      %p336 = scmp.ne.s32.totalorder %s319, %s335
      %p337 = scmp.eq.s32.totalorder %s33, 0
      %p338 = por %p336, %p337
      %p339 = scmp.le.s32.totalorder 1, %s27
      %p340 = scmp.lt.s32.totalorder %s27, 3
      %p341 = pnand %p339, %p340
      %p342 = pneg %p341
      // Predicated region
      $region9: #{tpu_custom_call.1} parent=5 // pred_check
        _
      $region10: #{tpu_custom_call.1} parent=5 // pred_check_branch
        %344 = sbr.rel (%p341) target = $region12
      $region11: #{tpu_custom_call.1} parent=5 // pred_region
        %s345 = ssub.s32 %s27, 1
        // Predicated region
        $region13: #{tpu_custom_call.1} parent=11 // pred_check
          %p346 = pneg %p74
        $region14: #{tpu_custom_call.1} parent=11 // pred_check_branch
          %348 = sbr.rel (%p346) target = $region16
        $region15: #{tpu_custom_call.1} parent=11 // pred_region
          %s350 = ssub.s32 256, 256
          %351 = vsyncadd [#allocation6], %s350
          %s352 = sshll.u32 [#allocation5], 4
          %s353 = int_to_ptr.vmem [resolvable:$true] %s352
          %358 = dma.hbm_to_vmem [thread:$0]  %s1, 256, %s353, [#allocation6], 128, 128, 8
        $region16: #{tpu_custom_call.1} parent=11 // pred_fallthru
          _
        // Predicated region
        $region17: #{tpu_custom_call.1} parent=11 // pred_check
          %p359 = pneg %p95
        $region18: #{tpu_custom_call.1} parent=11 // pred_check_branch
          %361 = sbr.rel (%p359) target = $region20
        $region19: #{tpu_custom_call.1} parent=11 // pred_region
          _
        $region20: #{tpu_custom_call.1} parent=11 // pred_fallthru
          _
        // Predicated region
        $region21: #{tpu_custom_call.1} parent=11 // pred_check
          %p362 = pneg %p116
        $region22: #{tpu_custom_call.1} parent=11 // pred_check_branch
          %364 = sbr.rel (%p362) target = $region24
        $region23: #{tpu_custom_call.1} parent=11 // pred_region
          %s366 = ssub.s32 256, 256
          %367 = vsyncadd [#allocation6], %s366
          %s368 = sshll.u32 [#allocation7], 4
          %s369 = int_to_ptr.vmem [resolvable:$true] %s368
          %374 = dma.hbm_to_vmem [thread:$0]  %s3, 256, %s369, [#allocation6], 128, 128, 8
        $region24: #{tpu_custom_call.1} parent=11 // pred_fallthru
          _
        // Predicated region
        $region25: #{tpu_custom_call.1} parent=11 // pred_check
          %p375 = pneg %p137
        $region26: #{tpu_custom_call.1} parent=11 // pred_check_branch
          %377 = sbr.rel (%p375) target = $region28
        $region27: #{tpu_custom_call.1} parent=11 // pred_region
          _
        $region28: #{tpu_custom_call.1} parent=11 // pred_fallthru
          _
        // Predicated region
        $region29: #{tpu_custom_call.1} parent=11 // pred_check
          %p378 = pneg %p158
        $region30: #{tpu_custom_call.1} parent=11 // pred_check_branch
          %380 = sbr.rel (%p378) target = $region32
        $region31: #{tpu_custom_call.1} parent=11 // pred_region
          _
        $region32: #{tpu_custom_call.1} parent=11 // pred_fallthru
          _
        // Predicated region
        $region33: #{tpu_custom_call.1} parent=11 // pred_check
          %p381 = pneg %p179
        $region34: #{tpu_custom_call.1} parent=11 // pred_check_branch
          %383 = sbr.rel (%p381) target = $region36
        $region35: #{tpu_custom_call.1} parent=11 // pred_region
          _
        $region36: #{tpu_custom_call.1} parent=11 // pred_fallthru
          _
        // Predicated region
        $region37: #{tpu_custom_call.1} parent=11 // pred_check
          %p384 = pneg %p200
        $region38: #{tpu_custom_call.1} parent=11 // pred_check_branch
          %386 = sbr.rel (%p384) target = $region40
        $region39: #{tpu_custom_call.1} parent=11 // pred_region
          %s388 = ssub.s32 512, 512
          %389 = vsyncadd [#allocation9], %s388
          %s390 = sshll.u32 [#allocation8], 4
          %s391 = int_to_ptr.vmem [resolvable:$true] %s390
          %396 = dma.hbm_to_vmem [thread:$0]  %s7, 512, %s391, [#allocation9], 128, 128, 8
        $region40: #{tpu_custom_call.1} parent=11 // pred_fallthru
          _
        // Predicated region
        $region41: #{tpu_custom_call.1} parent=11 // pred_check
          %p397 = pneg %p221
        $region42: #{tpu_custom_call.1} parent=11 // pred_check_branch
          %399 = sbr.rel (%p397) target = $region44
        $region43: #{tpu_custom_call.1} parent=11 // pred_region
          _
        $region44: #{tpu_custom_call.1} parent=11 // pred_fallthru
          _
        // Predicated region
        $region45: #{tpu_custom_call.1} parent=11 // pred_check
          %p400 = pneg %p242
        $region46: #{tpu_custom_call.1} parent=11 // pred_check_branch
          %402 = sbr.rel (%p400) target = $region48
        $region47: #{tpu_custom_call.1} parent=11 // pred_region
          _
        $region48: #{tpu_custom_call.1} parent=11 // pred_fallthru
          _
        // Predicated region
        $region49: #{tpu_custom_call.1} parent=11 // pred_check
          %p403 = pneg %p263
        $region50: #{tpu_custom_call.1} parent=11 // pred_check_branch
          %405 = sbr.rel (%p403) target = $region52
        $region51: #{tpu_custom_call.1} parent=11 // pred_region
          _
        $region52: #{tpu_custom_call.1} parent=11 // pred_fallthru
          _
        // Predicated region
        $region53: #{tpu_custom_call.1} parent=11 // pred_check
          %p406 = pneg %p284
        $region54: #{tpu_custom_call.1} parent=11 // pred_check_branch
          %408 = sbr.rel (%p406) target = $region56
        $region55: #{tpu_custom_call.1} parent=11 // pred_region
          _
        $region56: #{tpu_custom_call.1} parent=11 // pred_fallthru
          _
        // Predicated region
        $region57: #{tpu_custom_call.1} parent=11 // pred_check
          %p409 = pneg %p305
        $region58: #{tpu_custom_call.1} parent=11 // pred_check_branch
          %411 = sbr.rel (%p409) target = $region60
        $region59: #{tpu_custom_call.1} parent=11 // pred_region
          _
        $region60: #{tpu_custom_call.1} parent=11 // pred_fallthru
          _
      $region12: #{tpu_custom_call.1} parent=5 // pred_fallthru
        _
      %p412 = scmp.lt.s32.totalorder %s27, 2
      // Predicated region
      $region61: #{tpu_custom_call.1} parent=5 // pred_check
        %p413 = pneg %p412
      $region62: #{tpu_custom_call.1} parent=5 // pred_check_branch
        %415 = sbr.rel (%p413) target = $region64
      $region63: #{tpu_custom_call.1} parent=5 // pred_region
        // Predicated region
        $region65: #{tpu_custom_call.1} parent=63 // pred_check
          %p416 = pneg %p47
        $region66: #{tpu_custom_call.1} parent=63 // pred_check_branch
          %418 = sbr.rel (%p416) target = $region68
        $region67: #{tpu_custom_call.1} parent=63 // pred_region
          %s419 = sand.u32 %s37, 1
          %s420 = scalar_lea.sflag [#allocation3], %s419
          %s421 = sand.u32 %s37, 1
          %s422 = smul.addr %s421, 8
          %s423 = scalar_lea.vmem [#allocation2], %s422
          %s425 = ssub.s32 128, 128
          %426 = vsyncadd %s420, %s425
          %s427 = smul.addr %s27, 128
          %s428 = scalar_lea.hbm %s0, %s427
          %s430 = sshll.u32 %s423, 4
          %s431 = int_to_ptr.vmem [resolvable:$true] %s430
          %433 = dma.hbm_to_vmem [thread:$0]  %s428, 128, %s431, %s420
        $region68: #{tpu_custom_call.1} parent=63 // pred_fallthru
          _
      $region64: #{tpu_custom_call.1} parent=5 // pred_fallthru
        _
      %p434 = scmp.le.s32.totalorder 1, %s27
      %p435 = scmp.lt.s32.totalorder %s27, 3
      %p436 = pnand %p434, %p435
      %p437 = pneg %p436
      // Predicated region
      $region69: #{tpu_custom_call.1} parent=5 // pred_check
        _
      $region70: #{tpu_custom_call.1} parent=5 // pred_check_branch
        %439 = sbr.rel (%p436) target = $region72
      $region71: #{tpu_custom_call.1} parent=5 // pred_region
        %s440 = ssub.s32 %s27, 1
        %s441 = sand.u32 %s40, 1
        %s442 = scalar_lea.sflag [#allocation3], %s441
        %s443 = sand.u32 %s40, 1
        %s444 = smul.addr %s443, 8
        %s445 = scalar_lea.vmem [#allocation2], %s444
        // Predicated region
        $region73: #{tpu_custom_call.1} parent=71 // pred_check
          %p446 = pneg %p53
        $region74: #{tpu_custom_call.1} parent=71 // pred_check_branch
          %448 = sbr.rel (%p446) target = $region76
        $region75: #{tpu_custom_call.1} parent=71 // pred_region
          %449 = dma.done %s442, 128
        $region76: #{tpu_custom_call.1} parent=71 // pred_fallthru
          _
        // Predicated region
        $region77: #{tpu_custom_call.1} parent=71 // pred_check
          %p450 = pneg %p74
        $region78: #{tpu_custom_call.1} parent=71 // pred_check_branch
          %452 = sbr.rel (%p450) target = $region80
        $region79: #{tpu_custom_call.1} parent=71 // pred_region
          %453 = dma.done [#allocation6], 256
        $region80: #{tpu_custom_call.1} parent=71 // pred_fallthru
          _
        // Predicated region
        $region81: #{tpu_custom_call.1} parent=71 // pred_check
          %p454 = pneg %p116
        $region82: #{tpu_custom_call.1} parent=71 // pred_check_branch
          %456 = sbr.rel (%p454) target = $region84
        $region83: #{tpu_custom_call.1} parent=71 // pred_region
          %457 = dma.done [#allocation6], 256
        $region84: #{tpu_custom_call.1} parent=71 // pred_fallthru
          _
        // Predicated region
        $region85: #{tpu_custom_call.1} parent=71 // pred_check
          %p458 = pneg %p200
        $region86: #{tpu_custom_call.1} parent=71 // pred_check_branch
          %460 = sbr.rel (%p458) target = $region88
        $region87: #{tpu_custom_call.1} parent=71 // pred_region
          %461 = dma.done [#allocation9], 512
        $region88: #{tpu_custom_call.1} parent=71 // pred_fallthru
          _
        %s462 = sand.u32 %s40, 1
        %s463 = scalar_lea.sflag [#allocation3], %s462
        %s464 = sand.u32 %s40, 1
        %s465 = smul.addr %s464, 8
        %s466 = scalar_lea.vmem [#allocation2], %s465
        %p467 = pneg %p53
        %p468 = pneg %p50
        %p469 = pneg %p74
        %p470 = pneg %p71
        %p471 = pneg %p95
        %p472 = pneg %p92
        %p473 = pneg %p116
        %p474 = pneg %p113
        %p475 = pneg %p137
        %p476 = pneg %p134
        %p477 = pneg %p158
        %p478 = pneg %p155
        %p479 = pneg %p179
        %p480 = pneg %p176
        %p481 = pneg %p200
        %p482 = pneg %p197
        %p483 = pneg %p221
        %p484 = pneg %p218
        %p485 = pneg %p242
        %p486 = pneg %p239
        %p487 = pneg %p263
        %p488 = pneg %p260
        %p489 = pneg %p284
        %p490 = pneg %p281
        %p491 = pneg %p305
        %p492 = pneg %p302
        %p493 = pneg %p331
        %p494 = pneg %p328
        %s495 = sand.u32 %s318, 1
        %s496 = scalar_lea.sflag [#allocation4], %s495
        %s497 = sand.u32 %s318, 1
        %s498 = smul.addr %s497, 8
        %s499 = scalar_lea.vmem [#allocation10], %s498
        %v500 = vld [vmem:[%s445] sm:$0xff]
        %v501 = vld [vmem:[#allocation5] sm:$0xff]
        %v502 = vld [vmem:[#allocation5 + $0x8] sm:$0xff]
        %v503 = vld [vmem:[%s2] sm:$0x1]
        %v505 = vlaneseq
        %v506 = vshrl.u32 %v505, 7
        %v507 = vsub.s32 0, %v506
        %v508 = vrot.slane %v503, %v507
        %vm510 = vcmask 130048
        %v512 = vsel %vm510, %v500, 0
        %514 = vmatprep.subr.mxu0 0.0
        %515 = vmatpush1.msra.mxu0 %v501
        %516 = vmatprep.subr.mxu0 0.0
        %517 = vmatpush1.msra.mxu0 %v502
        %518 = vmatprep.subr.mxu0 0.0
        %519 = vmatpush1.msra.mxu0 0.0
        %520 = vmatprep.subr.mxu0 0.0
        %521 = vmatpush1.msra.mxu0 0.0
        %522 = vmatprep.subr.mxu0 0.0
        %523 = vmatpush1.msra.mxu0 0.0
        %524 = vmatprep.subr.mxu0 0.0
        %525 = vmatpush1.msra.mxu0 0.0
        %526 = vmatprep.subr.mxu0 0.0
        %527 = vmatpush1.msra.mxu0 0.0
        %528 = vmatprep.subr.mxu0 0.0
        %529 = vmatpush1.msra.mxu0 0.0
        %530 = vmatprep.subr.mxu0 0.0
        %531 = vmatpush1.msra.mxu0 0.0
        %532 = vmatprep.subr.mxu0 0.0
        %533 = vmatpush1.msra.mxu0 0.0
        %534 = vmatprep.subr.mxu0 0.0
        %535 = vmatpush1.msra.mxu0 0.0
        %536 = vmatprep.subr.mxu0 0.0
        %537 = vmatpush1.msra.mxu0 0.0
        %538 = vmatprep.subr.mxu0 0.0
        %539 = vmatpush1.msra.mxu0 0.0
        %540 = vmatprep.subr.mxu0 0.0
        %541 = vmatpush1.msra.mxu0 0.0
        %542 = vmatprep.subr.mxu0 0.0
        %543 = vmatpush1.msra.mxu0 0.0
        %544 = vmatprep.subr.mxu0 0.0
        %545 = vmatpush1.msra.mxu0 0.0
        %546 = vmatprep.subr.mxu0 0.0
        %547 = vmatpush1.msra.mxu0 0.0
        %548 = vmatprep.subr.mxu0 0.0
        %549 = vmatpush1.msra.mxu0 0.0
        %550 = vmatprep.subr.mxu0 0.0
        %551 = vmatpush1.msra.mxu0 0.0
        %552 = vmatprep.subr.mxu0 0.0
        %553 = vmatpush1.msra.mxu0 0.0
        %554 = vmatprep.subr.mxu0 0.0
        %555 = vmatpush1.msra.mxu0 0.0
        %556 = vmatprep.subr.mxu0 0.0
        %557 = vmatpush1.msra.mxu0 0.0
        %558 = vmatprep.subr.mxu0 0.0
        %559 = vmatpush1.msra.mxu0 0.0
        %560 = vmatprep.subr.mxu0 0.0
        %561 = vmatpush1.msra.mxu0 0.0
        %562 = vmatprep.subr.mxu0 0.0
        %563 = vmatpush1.msra.mxu0 0.0
        %564 = vmatprep.subr.mxu0 0.0
        %565 = vmatpush1.msra.mxu0 0.0
        %566 = vmatprep.subr.mxu0 0.0
        %567 = vmatpush1.msra.mxu0 0.0
        %568 = vmatprep.subr.mxu0 0.0
        %569 = vmatpush1.msra.mxu0 0.0
        %570 = vmatprep.subr.mxu0 0.0
        %571 = vmatpush1.msra.mxu0 0.0
        %572 = vmatprep.subr.mxu0 0.0
        %573 = vmatpush1.msra.mxu0 0.0
        %574 = vmatprep.subr.mxu0 0.0
        %575 = vmatpush1.msra.mxu0 0.0
        %576 = vmatprep.subr.mxu0 0.0
        %577 = vmatpush1.msra.mxu0 0.0
        %578 = vmatprep.mubr.f32.mxu0 0.0
        %579 = vmatmul.mubr.f32.gmra.mrb[0].mxu0 %v512
        %v580 = vpop.f32.mrb[0].mxu0
        %v581 = vadd.f32 %v508, %v580
        %v582 = vpop.f32.mrb[0].mxu0
        %583 = vdwg.mxu0
        %v584 = vld [vmem:[#allocation7] sm:$0xff]
        %v585 = vld [vmem:[#allocation7 + $0x8] sm:$0xff]
        %v586 = vld [vmem:[%s4] sm:$0x1]
        %v588 = vlaneseq
        %v589 = vshrl.u32 %v588, 7
        %v590 = vsub.s32 0, %v589
        %v591 = vrot.slane %v586, %v590
        %593 = vmatprep.subr.mxu0 0.0
        %594 = vmatpush1.msra.mxu0 %v584
        %595 = vmatprep.subr.mxu0 0.0
        %596 = vmatpush1.msra.mxu0 %v585
        %597 = vmatprep.subr.mxu0 0.0
        %598 = vmatpush1.msra.mxu0 0.0
        %599 = vmatprep.subr.mxu0 0.0
        %600 = vmatpush1.msra.mxu0 0.0
        %601 = vmatprep.subr.mxu0 0.0
        %602 = vmatpush1.msra.mxu0 0.0
        %603 = vmatprep.subr.mxu0 0.0
        %604 = vmatpush1.msra.mxu0 0.0
        %605 = vmatprep.subr.mxu0 0.0
        %606 = vmatpush1.msra.mxu0 0.0
        %607 = vmatprep.subr.mxu0 0.0
        %608 = vmatpush1.msra.mxu0 0.0
        %609 = vmatprep.subr.mxu0 0.0
        %610 = vmatpush1.msra.mxu0 0.0
        %611 = vmatprep.subr.mxu0 0.0
        %612 = vmatpush1.msra.mxu0 0.0
        %613 = vmatprep.subr.mxu0 0.0
        %614 = vmatpush1.msra.mxu0 0.0
        %615 = vmatprep.subr.mxu0 0.0
        %616 = vmatpush1.msra.mxu0 0.0
        %617 = vmatprep.subr.mxu0 0.0
        %618 = vmatpush1.msra.mxu0 0.0
        %619 = vmatprep.subr.mxu0 0.0
        %620 = vmatpush1.msra.mxu0 0.0
        %621 = vmatprep.subr.mxu0 0.0
        %622 = vmatpush1.msra.mxu0 0.0
        %623 = vmatprep.subr.mxu0 0.0
        %624 = vmatpush1.msra.mxu0 0.0
        %625 = vmatprep.subr.mxu0 0.0
        %626 = vmatpush1.msra.mxu0 0.0
        %627 = vmatprep.subr.mxu0 0.0
        %628 = vmatpush1.msra.mxu0 0.0
        %629 = vmatprep.subr.mxu0 0.0
        %630 = vmatpush1.msra.mxu0 0.0
        %631 = vmatprep.subr.mxu0 0.0
        %632 = vmatpush1.msra.mxu0 0.0
        %633 = vmatprep.subr.mxu0 0.0
        %634 = vmatpush1.msra.mxu0 0.0
        %635 = vmatprep.subr.mxu0 0.0
        %636 = vmatpush1.msra.mxu0 0.0
        %637 = vmatprep.subr.mxu0 0.0
        %638 = vmatpush1.msra.mxu0 0.0
        %639 = vmatprep.subr.mxu0 0.0
        %640 = vmatpush1.msra.mxu0 0.0
        %641 = vmatprep.subr.mxu0 0.0
        %642 = vmatpush1.msra.mxu0 0.0
        %643 = vmatprep.subr.mxu0 0.0
        %644 = vmatpush1.msra.mxu0 0.0
        %645 = vmatprep.subr.mxu0 0.0
        %646 = vmatpush1.msra.mxu0 0.0
        %647 = vmatprep.subr.mxu0 0.0
        %648 = vmatpush1.msra.mxu0 0.0
        %649 = vmatprep.subr.mxu0 0.0
        %650 = vmatpush1.msra.mxu0 0.0
        %651 = vmatprep.subr.mxu0 0.0
        %652 = vmatpush1.msra.mxu0 0.0
        %653 = vmatprep.subr.mxu0 0.0
        %654 = vmatpush1.msra.mxu0 0.0
        %655 = vmatprep.subr.mxu0 0.0
        %656 = vmatpush1.msra.mxu0 0.0
        %657 = vmatprep.mubr.f32.mxu0 0.0
        %658 = vmatmul.mubr.f32.gmra.mrb[0].mxu0 %v512
        %v659 = vpop.f32.mrb[0].mxu0
        %v660 = vadd.f32 %v591, %v659
        %v661 = vpop.f32.mrb[0].mxu0
        %662 = vdwg.mxu0
        %v663 = vld [vmem:[%s5] sm:$0xff]
        %v664 = vld [vmem:[%s5 + $0x8] sm:$0xff]
        %v665 = vld [vmem:[%s6] sm:$0x1]
        %v667 = vlaneseq
        %v668 = vshrl.u32 %v667, 7
        %v669 = vsub.s32 0, %v668
        %v670 = vrot.slane %v665, %v669
        %672 = vmatprep.subr.mxu0 0.0
        %673 = vmatpush1.msra.mxu0 %v663
        %674 = vmatprep.subr.mxu0 0.0
        %675 = vmatpush1.msra.mxu0 %v664
        %676 = vmatprep.subr.mxu0 0.0
        %677 = vmatpush1.msra.mxu0 0.0
        %678 = vmatprep.subr.mxu0 0.0
        %679 = vmatpush1.msra.mxu0 0.0
        %680 = vmatprep.subr.mxu0 0.0
        %681 = vmatpush1.msra.mxu0 0.0
        %682 = vmatprep.subr.mxu0 0.0
        %683 = vmatpush1.msra.mxu0 0.0
        %684 = vmatprep.subr.mxu0 0.0
        %685 = vmatpush1.msra.mxu0 0.0
        %686 = vmatprep.subr.mxu0 0.0
        %687 = vmatpush1.msra.mxu0 0.0
        %688 = vmatprep.subr.mxu0 0.0
        %689 = vmatpush1.msra.mxu0 0.0
        %690 = vmatprep.subr.mxu0 0.0
        %691 = vmatpush1.msra.mxu0 0.0
        %692 = vmatprep.subr.mxu0 0.0
        %693 = vmatpush1.msra.mxu0 0.0
        %694 = vmatprep.subr.mxu0 0.0
        %695 = vmatpush1.msra.mxu0 0.0
        %696 = vmatprep.subr.mxu0 0.0
        %697 = vmatpush1.msra.mxu0 0.0
        %698 = vmatprep.subr.mxu0 0.0
        %699 = vmatpush1.msra.mxu0 0.0
        %700 = vmatprep.subr.mxu0 0.0
        %701 = vmatpush1.msra.mxu0 0.0
        %702 = vmatprep.subr.mxu0 0.0
        %703 = vmatpush1.msra.mxu0 0.0
        %704 = vmatprep.subr.mxu0 0.0
        %705 = vmatpush1.msra.mxu0 0.0
        %706 = vmatprep.subr.mxu0 0.0
        %707 = vmatpush1.msra.mxu0 0.0
        %708 = vmatprep.subr.mxu0 0.0
        %709 = vmatpush1.msra.mxu0 0.0
        %710 = vmatprep.subr.mxu0 0.0
        %711 = vmatpush1.msra.mxu0 0.0
        %712 = vmatprep.subr.mxu0 0.0
        %713 = vmatpush1.msra.mxu0 0.0
        %714 = vmatprep.subr.mxu0 0.0
        %715 = vmatpush1.msra.mxu0 0.0
        %716 = vmatprep.subr.mxu0 0.0
        %717 = vmatpush1.msra.mxu0 0.0
        %718 = vmatprep.subr.mxu0 0.0
        %719 = vmatpush1.msra.mxu0 0.0
        %720 = vmatprep.subr.mxu0 0.0
        %721 = vmatpush1.msra.mxu0 0.0
        %722 = vmatprep.subr.mxu0 0.0
        %723 = vmatpush1.msra.mxu0 0.0
        %724 = vmatprep.subr.mxu0 0.0
        %725 = vmatpush1.msra.mxu0 0.0
        %726 = vmatprep.subr.mxu0 0.0
        %727 = vmatpush1.msra.mxu0 0.0
        %728 = vmatprep.subr.mxu0 0.0
        %729 = vmatpush1.msra.mxu0 0.0
        %730 = vmatprep.subr.mxu0 0.0
        %731 = vmatpush1.msra.mxu0 0.0
        %732 = vmatprep.subr.mxu0 0.0
        %733 = vmatpush1.msra.mxu0 0.0
        %734 = vmatprep.subr.mxu0 0.0
        %735 = vmatpush1.msra.mxu0 0.0
        %736 = vmatprep.mubr.f32.mxu0 0.0
        %737 = vmatmul.mubr.f32.gmra.mrb[0].mxu0 %v512
        %v738 = vpop.f32.mrb[0].mxu0
        %v739 = vadd.f32 %v670, %v738
        %v740 = vpop.f32.mrb[0].mxu0
        %741 = vdwg.mxu0
        %v742 = vmul.f32 %v581, 0.17677669
        %vm743 = vcmask 64512
        %v745 = vsel %vm743, %v742, 0
        %v748 = vsel %vm743, %v660, 0
        %750 = vmatprep.subr.mxu0 0.0
        %751 = vmatpush1.xpose.msra.mxu0 %v748
        %752 = vmatprep.subr.mxu0 0.0
        %753 = vmatpush1.xpose.msra.mxu0 0.0
        %754 = vmatprep.subr.mxu0 0.0
        %755 = vmatpush1.xpose.msra.mxu0 0.0
        %756 = vmatprep.subr.mxu0 0.0
        %757 = vmatpush1.xpose.msra.mxu0 0.0
        %758 = vmatprep.subr.mxu0 0.0
        %759 = vmatpush1.xpose.msra.mxu0 0.0
        %760 = vmatprep.subr.mxu0 0.0
        %761 = vmatpush1.xpose.msra.mxu0 0.0
        %762 = vmatprep.subr.mxu0 0.0
        %763 = vmatpush1.xpose.msra.mxu0 0.0
        %764 = vmatprep.subr.mxu0 0.0
        %765 = vmatpush1.xpose.msra.mxu0 0.0
        %766 = vmatprep.subr.mxu0 0.0
        %767 = vmatpush1.xpose.msra.mxu0 0.0
        %768 = vmatprep.subr.mxu0 0.0
        %769 = vmatpush1.xpose.msra.mxu0 0.0
        %770 = vmatprep.subr.mxu0 0.0
        %771 = vmatpush1.xpose.msra.mxu0 0.0
        %772 = vmatprep.subr.mxu0 0.0
        %773 = vmatpush1.xpose.msra.mxu0 0.0
        %774 = vmatprep.subr.mxu0 0.0
        %775 = vmatpush1.xpose.msra.mxu0 0.0
        %776 = vmatprep.subr.mxu0 0.0
        %777 = vmatpush1.xpose.msra.mxu0 0.0
        %778 = vmatprep.subr.mxu0 0.0
        %779 = vmatpush1.xpose.msra.mxu0 0.0
        %780 = vmatprep.subr.mxu0 0.0
        %781 = vmatpush1.xpose.msra.mxu0 0.0
        %782 = vmatprep.subr.mxu0 0.0
        %783 = vmatpush1.xpose.msra.mxu0 0.0
        %784 = vmatprep.subr.mxu0 0.0
        %785 = vmatpush1.xpose.msra.mxu0 0.0
        %786 = vmatprep.subr.mxu0 0.0
        %787 = vmatpush1.xpose.msra.mxu0 0.0
        %788 = vmatprep.subr.mxu0 0.0
        %789 = vmatpush1.xpose.msra.mxu0 0.0
        %790 = vmatprep.subr.mxu0 0.0
        %791 = vmatpush1.xpose.msra.mxu0 0.0
        %792 = vmatprep.subr.mxu0 0.0
        %793 = vmatpush1.xpose.msra.mxu0 0.0
        %794 = vmatprep.subr.mxu0 0.0
        %795 = vmatpush1.xpose.msra.mxu0 0.0
        %796 = vmatprep.subr.mxu0 0.0
        %797 = vmatpush1.xpose.msra.mxu0 0.0
        %798 = vmatprep.subr.mxu0 0.0
        %799 = vmatpush1.xpose.msra.mxu0 0.0
        %800 = vmatprep.subr.mxu0 0.0
        %801 = vmatpush1.xpose.msra.mxu0 0.0
        %802 = vmatprep.subr.mxu0 0.0
        %803 = vmatpush1.xpose.msra.mxu0 0.0
        %804 = vmatprep.subr.mxu0 0.0
        %805 = vmatpush1.xpose.msra.mxu0 0.0
        %806 = vmatprep.subr.mxu0 0.0
        %807 = vmatpush1.xpose.msra.mxu0 0.0
        %808 = vmatprep.subr.mxu0 0.0
        %809 = vmatpush1.xpose.msra.mxu0 0.0
        %810 = vmatprep.subr.mxu0 0.0
        %811 = vmatpush1.xpose.msra.mxu0 0.0
        %812 = vmatprep.subr.mxu0 0.0
        %813 = vmatpush1.xpose.msra.mxu0 0.0
        %814 = vmatprep.mubr.f32.mxu0 0.0
        %815 = vmatmul.mubr.f32.gmra.mrb[0].mxu0 %v745
        %v816 = vpop.f32.mrb[0].mxu0
        %v817 = vadd.f32 0.0, %v816
        %v818 = vpop.f32.mrb[0].mxu0
        %819 = vdwg.mxu0
        %v820 = vsel %vm743, %v817, -inf
        %821 = vmax.xlane.f32.xlu0 %v820
        %v822 = vpop.xlane.xlu0 %821
        %v823 = vsub.f32 %v817, %v822
        %v824 = vmul.f32 %v823, 1.442695
        %v825 = vpow.pop %v824
        %v826 = vsel %vm743, %v825, 0.0
        %827 = vadd.xlane.f32.xlu0 %v826
        %v828 = vpop.xlane.xlu0 %827
        %v830 = vsel %vm743, %v825, 0
        %832 = vmatprep.subr.mxu0 0.0
        %833 = vmatpush1.msra.mxu0 %v739
        %834 = vmatprep.subr.mxu0 0.0
        %835 = vmatpush1.msra.mxu0 0.0
        %836 = vmatprep.subr.mxu0 0.0
        %837 = vmatpush1.msra.mxu0 0.0
        %838 = vmatprep.subr.mxu0 0.0
        %839 = vmatpush1.msra.mxu0 0.0
        %840 = vmatprep.subr.mxu0 0.0
        %841 = vmatpush1.msra.mxu0 0.0
        %842 = vmatprep.subr.mxu0 0.0
        %843 = vmatpush1.msra.mxu0 0.0
        %844 = vmatprep.subr.mxu0 0.0
        %845 = vmatpush1.msra.mxu0 0.0
        %846 = vmatprep.subr.mxu0 0.0
        %847 = vmatpush1.msra.mxu0 0.0
        %848 = vmatprep.subr.mxu0 0.0
        %849 = vmatpush1.msra.mxu0 0.0
        %850 = vmatprep.subr.mxu0 0.0
        %851 = vmatpush1.msra.mxu0 0.0
        %852 = vmatprep.subr.mxu0 0.0
        %853 = vmatpush1.msra.mxu0 0.0
        %854 = vmatprep.subr.mxu0 0.0
        %855 = vmatpush1.msra.mxu0 0.0
        %856 = vmatprep.subr.mxu0 0.0
        %857 = vmatpush1.msra.mxu0 0.0
        %858 = vmatprep.subr.mxu0 0.0
        %859 = vmatpush1.msra.mxu0 0.0
        %860 = vmatprep.subr.mxu0 0.0
        %861 = vmatpush1.msra.mxu0 0.0
        %862 = vmatprep.subr.mxu0 0.0
        %863 = vmatpush1.msra.mxu0 0.0
        %864 = vmatprep.subr.mxu0 0.0
        %865 = vmatpush1.msra.mxu0 0.0
        %866 = vmatprep.subr.mxu0 0.0
        %867 = vmatpush1.msra.mxu0 0.0
        %868 = vmatprep.subr.mxu0 0.0
        %869 = vmatpush1.msra.mxu0 0.0
        %870 = vmatprep.subr.mxu0 0.0
        %871 = vmatpush1.msra.mxu0 0.0
        %872 = vmatprep.subr.mxu0 0.0
        %873 = vmatpush1.msra.mxu0 0.0
        %874 = vmatprep.subr.mxu0 0.0
        %875 = vmatpush1.msra.mxu0 0.0
        %876 = vmatprep.subr.mxu0 0.0
        %877 = vmatpush1.msra.mxu0 0.0
        %878 = vmatprep.subr.mxu0 0.0
        %879 = vmatpush1.msra.mxu0 0.0
        %880 = vmatprep.subr.mxu0 0.0
        %881 = vmatpush1.msra.mxu0 0.0
        %882 = vmatprep.subr.mxu0 0.0
        %883 = vmatpush1.msra.mxu0 0.0
        %884 = vmatprep.subr.mxu0 0.0
        %885 = vmatpush1.msra.mxu0 0.0
        %886 = vmatprep.subr.mxu0 0.0
        %887 = vmatpush1.msra.mxu0 0.0
        %888 = vmatprep.subr.mxu0 0.0
        %889 = vmatpush1.msra.mxu0 0.0
        %890 = vmatprep.subr.mxu0 0.0
        %891 = vmatpush1.msra.mxu0 0.0
        %892 = vmatprep.subr.mxu0 0.0
        %893 = vmatpush1.msra.mxu0 0.0
        %894 = vmatprep.subr.mxu0 0.0
        %895 = vmatpush1.msra.mxu0 0.0
        %896 = vmatprep.mubr.f32.mxu0 0.0
        %897 = vmatmul.mubr.f32.gmra.mrb[0].mxu0 %v830
        %v898 = vpop.f32.mrb[0].mxu0
        %v899 = vadd.f32 0.0, %v898
        %v900 = vpop.f32.mrb[0].mxu0
        %901 = vdwg.mxu0
        %v902 = vrcp.pop %v828
        %v903 = vmul.f32 1.0, %v902
        %v904 = vmul.f32 %v899, %v903
        %905 = vrot.lane.b32.xlu0 %v742, 120
        %v906 = vpop.permute.xlu0 %905
        %907 = vrot.lane.b32.xlu0 %v660, 120
        %v908 = vpop.permute.xlu0 %907
        %v909 = vsel %vm743, %v906, 0
        %v911 = vsel %vm743, %v908, 0
        %913 = vmatprep.subr.mxu0 0.0
        %914 = vmatpush1.xpose.msra.mxu0 %v911
        %915 = vmatprep.subr.mxu0 0.0
        %916 = vmatpush1.xpose.msra.mxu0 0.0
        %917 = vmatprep.subr.mxu0 0.0
        %918 = vmatpush1.xpose.msra.mxu0 0.0
        %919 = vmatprep.subr.mxu0 0.0
        %920 = vmatpush1.xpose.msra.mxu0 0.0
        %921 = vmatprep.subr.mxu0 0.0
        %922 = vmatpush1.xpose.msra.mxu0 0.0
        %923 = vmatprep.subr.mxu0 0.0
        %924 = vmatpush1.xpose.msra.mxu0 0.0
        %925 = vmatprep.subr.mxu0 0.0
        %926 = vmatpush1.xpose.msra.mxu0 0.0
        %927 = vmatprep.subr.mxu0 0.0
        %928 = vmatpush1.xpose.msra.mxu0 0.0
        %929 = vmatprep.subr.mxu0 0.0
        %930 = vmatpush1.xpose.msra.mxu0 0.0
        %931 = vmatprep.subr.mxu0 0.0
        %932 = vmatpush1.xpose.msra.mxu0 0.0
        %933 = vmatprep.subr.mxu0 0.0
        %934 = vmatpush1.xpose.msra.mxu0 0.0
        %935 = vmatprep.subr.mxu0 0.0
        %936 = vmatpush1.xpose.msra.mxu0 0.0
        %937 = vmatprep.subr.mxu0 0.0
        %938 = vmatpush1.xpose.msra.mxu0 0.0
        %939 = vmatprep.subr.mxu0 0.0
        %940 = vmatpush1.xpose.msra.mxu0 0.0
        %941 = vmatprep.subr.mxu0 0.0
        %942 = vmatpush1.xpose.msra.mxu0 0.0
        %943 = vmatprep.subr.mxu0 0.0
        %944 = vmatpush1.xpose.msra.mxu0 0.0
        %945 = vmatprep.subr.mxu0 0.0
        %946 = vmatpush1.xpose.msra.mxu0 0.0
        %947 = vmatprep.subr.mxu0 0.0
        %948 = vmatpush1.xpose.msra.mxu0 0.0
        %949 = vmatprep.subr.mxu0 0.0
        %950 = vmatpush1.xpose.msra.mxu0 0.0
        %951 = vmatprep.subr.mxu0 0.0
        %952 = vmatpush1.xpose.msra.mxu0 0.0
        %953 = vmatprep.subr.mxu0 0.0
        %954 = vmatpush1.xpose.msra.mxu0 0.0
        %955 = vmatprep.subr.mxu0 0.0
        %956 = vmatpush1.xpose.msra.mxu0 0.0
        %957 = vmatprep.subr.mxu0 0.0
        %958 = vmatpush1.xpose.msra.mxu0 0.0
        %959 = vmatprep.subr.mxu0 0.0
        %960 = vmatpush1.xpose.msra.mxu0 0.0
        %961 = vmatprep.subr.mxu0 0.0
        %962 = vmatpush1.xpose.msra.mxu0 0.0
        %963 = vmatprep.subr.mxu0 0.0
        %964 = vmatpush1.xpose.msra.mxu0 0.0
        %965 = vmatprep.subr.mxu0 0.0
        %966 = vmatpush1.xpose.msra.mxu0 0.0
        %967 = vmatprep.subr.mxu0 0.0
        %968 = vmatpush1.xpose.msra.mxu0 0.0
        %969 = vmatprep.subr.mxu0 0.0
        %970 = vmatpush1.xpose.msra.mxu0 0.0
        %971 = vmatprep.subr.mxu0 0.0
        %972 = vmatpush1.xpose.msra.mxu0 0.0
        %973 = vmatprep.subr.mxu0 0.0
        %974 = vmatpush1.xpose.msra.mxu0 0.0
        %975 = vmatprep.subr.mxu0 0.0
        %976 = vmatpush1.xpose.msra.mxu0 0.0
        %977 = vmatprep.mubr.f32.mxu0 0.0
        %978 = vmatmul.mubr.f32.gmra.mrb[0].mxu0 %v909
        %v979 = vpop.f32.mrb[0].mxu0
        %v980 = vadd.f32 0.0, %v979
        %v981 = vpop.f32.mrb[0].mxu0
        %982 = vdwg.mxu0
        %v983 = vsel %vm743, %v980, -inf
        %984 = vmax.xlane.f32.xlu0 %v983
        %v985 = vpop.xlane.xlu0 %984
        %v986 = vsub.f32 %v980, %v985
        %v987 = vmul.f32 %v986, 1.442695
        %v988 = vpow.pop %v987
        %v989 = vsel %vm743, %v988, 0.0
        %990 = vadd.xlane.f32.xlu0 %v989
        %v991 = vpop.xlane.xlu0 %990
        %993 = vrot.lane.b32.xlu0 %v739, 120
        %v994 = vpop.permute.xlu0 %993
        %v997 = vsel %vm743, %v988, 0
        %999 = vmatprep.subr.mxu0 0.0
        %1000 = vmatpush1.msra.mxu0 %v994
        %1001 = vmatprep.subr.mxu0 0.0
        %1002 = vmatpush1.msra.mxu0 0.0
        %1003 = vmatprep.subr.mxu0 0.0
        %1004 = vmatpush1.msra.mxu0 0.0
        %1005 = vmatprep.subr.mxu0 0.0
        %1006 = vmatpush1.msra.mxu0 0.0
        %1007 = vmatprep.subr.mxu0 0.0
        %1008 = vmatpush1.msra.mxu0 0.0
        %1009 = vmatprep.subr.mxu0 0.0
        %1010 = vmatpush1.msra.mxu0 0.0
        %1011 = vmatprep.subr.mxu0 0.0
        %1012 = vmatpush1.msra.mxu0 0.0
        %1013 = vmatprep.subr.mxu0 0.0
        %1014 = vmatpush1.msra.mxu0 0.0
        %1015 = vmatprep.subr.mxu0 0.0
        %1016 = vmatpush1.msra.mxu0 0.0
        %1017 = vmatprep.subr.mxu0 0.0
        %1018 = vmatpush1.msra.mxu0 0.0
        %1019 = vmatprep.subr.mxu0 0.0
        %1020 = vmatpush1.msra.mxu0 0.0
        %1021 = vmatprep.subr.mxu0 0.0
        %1022 = vmatpush1.msra.mxu0 0.0
        %1023 = vmatprep.subr.mxu0 0.0
        %1024 = vmatpush1.msra.mxu0 0.0
        %1025 = vmatprep.subr.mxu0 0.0
        %1026 = vmatpush1.msra.mxu0 0.0
        %1027 = vmatprep.subr.mxu0 0.0
        %1028 = vmatpush1.msra.mxu0 0.0
        %1029 = vmatprep.subr.mxu0 0.0
        %1030 = vmatpush1.msra.mxu0 0.0
        %1031 = vmatprep.subr.mxu0 0.0
        %1032 = vmatpush1.msra.mxu0 0.0
        %1033 = vmatprep.subr.mxu0 0.0
        %1034 = vmatpush1.msra.mxu0 0.0
        %1035 = vmatprep.subr.mxu0 0.0
        %1036 = vmatpush1.msra.mxu0 0.0
        %1037 = vmatprep.subr.mxu0 0.0
        %1038 = vmatpush1.msra.mxu0 0.0
        %1039 = vmatprep.subr.mxu0 0.0
        %1040 = vmatpush1.msra.mxu0 0.0
        %1041 = vmatprep.subr.mxu0 0.0
        %1042 = vmatpush1.msra.mxu0 0.0
        %1043 = vmatprep.subr.mxu0 0.0
        %1044 = vmatpush1.msra.mxu0 0.0
        %1045 = vmatprep.subr.mxu0 0.0
        %1046 = vmatpush1.msra.mxu0 0.0
        %1047 = vmatprep.subr.mxu0 0.0
        %1048 = vmatpush1.msra.mxu0 0.0
        %1049 = vmatprep.subr.mxu0 0.0
        %1050 = vmatpush1.msra.mxu0 0.0
        %1051 = vmatprep.subr.mxu0 0.0
        %1052 = vmatpush1.msra.mxu0 0.0
        %1053 = vmatprep.subr.mxu0 0.0
        %1054 = vmatpush1.msra.mxu0 0.0
        %1055 = vmatprep.subr.mxu0 0.0
        %1056 = vmatpush1.msra.mxu0 0.0
        %1057 = vmatprep.subr.mxu0 0.0
        %1058 = vmatpush1.msra.mxu0 0.0
        %1059 = vmatprep.subr.mxu0 0.0
        %1060 = vmatpush1.msra.mxu0 0.0
        %1061 = vmatprep.subr.mxu0 0.0
        %1062 = vmatpush1.msra.mxu0 0.0
        %1063 = vmatprep.mubr.f32.mxu0 0.0
        %1064 = vmatmul.mubr.f32.gmra.mrb[0].mxu0 %v997
        %v1065 = vpop.f32.mrb[0].mxu0
        %v1066 = vadd.f32 0.0, %v1065
        %v1067 = vpop.f32.mrb[0].mxu0
        %1068 = vdwg.mxu0
        %v1069 = vrcp.pop %v991
        %v1070 = vmul.f32 1.0, %v1069
        %v1071 = vmul.f32 %v1066, %v1070
        %1072 = vrot.lane.b32.xlu0 %v742, 112
        %v1073 = vpop.permute.xlu0 %1072
        %1074 = vrot.lane.b32.xlu0 %v660, 112
        %v1075 = vpop.permute.xlu0 %1074
        %v1076 = vsel %vm743, %v1073, 0
        %v1078 = vsel %vm743, %v1075, 0
        %1080 = vmatprep.subr.mxu0 0.0
        %1081 = vmatpush1.xpose.msra.mxu0 %v1078
        %1082 = vmatprep.subr.mxu0 0.0
        %1083 = vmatpush1.xpose.msra.mxu0 0.0
        %1084 = vmatprep.subr.mxu0 0.0
        %1085 = vmatpush1.xpose.msra.mxu0 0.0
        %1086 = vmatprep.subr.mxu0 0.0
        %1087 = vmatpush1.xpose.msra.mxu0 0.0
        %1088 = vmatprep.subr.mxu0 0.0
        %1089 = vmatpush1.xpose.msra.mxu0 0.0
        %1090 = vmatprep.subr.mxu0 0.0
        %1091 = vmatpush1.xpose.msra.mxu0 0.0
        %1092 = vmatprep.subr.mxu0 0.0
        %1093 = vmatpush1.xpose.msra.mxu0 0.0
        %1094 = vmatprep.subr.mxu0 0.0
        %1095 = vmatpush1.xpose.msra.mxu0 0.0
        %1096 = vmatprep.subr.mxu0 0.0
        %1097 = vmatpush1.xpose.msra.mxu0 0.0
        %1098 = vmatprep.subr.mxu0 0.0
        %1099 = vmatpush1.xpose.msra.mxu0 0.0
        %1100 = vmatprep.subr.mxu0 0.0
        %1101 = vmatpush1.xpose.msra.mxu0 0.0
        %1102 = vmatprep.subr.mxu0 0.0
        %1103 = vmatpush1.xpose.msra.mxu0 0.0
        %1104 = vmatprep.subr.mxu0 0.0
        %1105 = vmatpush1.xpose.msra.mxu0 0.0
        %1106 = vmatprep.subr.mxu0 0.0
        %1107 = vmatpush1.xpose.msra.mxu0 0.0
        %1108 = vmatprep.subr.mxu0 0.0
        %1109 = vmatpush1.xpose.msra.mxu0 0.0
        %1110 = vmatprep.subr.mxu0 0.0
        %1111 = vmatpush1.xpose.msra.mxu0 0.0
        %1112 = vmatprep.subr.mxu0 0.0
        %1113 = vmatpush1.xpose.msra.mxu0 0.0
        %1114 = vmatprep.subr.mxu0 0.0
        %1115 = vmatpush1.xpose.msra.mxu0 0.0
        %1116 = vmatprep.subr.mxu0 0.0
        %1117 = vmatpush1.xpose.msra.mxu0 0.0
        %1118 = vmatprep.subr.mxu0 0.0
        %1119 = vmatpush1.xpose.msra.mxu0 0.0
        %1120 = vmatprep.subr.mxu0 0.0
        %1121 = vmatpush1.xpose.msra.mxu0 0.0
        %1122 = vmatprep.subr.mxu0 0.0
        %1123 = vmatpush1.xpose.msra.mxu0 0.0
        %1124 = vmatprep.subr.mxu0 0.0
        %1125 = vmatpush1.xpose.msra.mxu0 0.0
        %1126 = vmatprep.subr.mxu0 0.0
        %1127 = vmatpush1.xpose.msra.mxu0 0.0
        %1128 = vmatprep.subr.mxu0 0.0
        %1129 = vmatpush1.xpose.msra.mxu0 0.0
        %1130 = vmatprep.subr.mxu0 0.0
        %1131 = vmatpush1.xpose.msra.mxu0 0.0
        %1132 = vmatprep.subr.mxu0 0.0
        %1133 = vmatpush1.xpose.msra.mxu0 0.0
        %1134 = vmatprep.subr.mxu0 0.0
        %1135 = vmatpush1.xpose.msra.mxu0 0.0
        %1136 = vmatprep.subr.mxu0 0.0
        %1137 = vmatpush1.xpose.msra.mxu0 0.0
        %1138 = vmatprep.subr.mxu0 0.0
        %1139 = vmatpush1.xpose.msra.mxu0 0.0
        %1140 = vmatprep.subr.mxu0 0.0
        %1141 = vmatpush1.xpose.msra.mxu0 0.0
        %1142 = vmatprep.subr.mxu0 0.0
        %1143 = vmatpush1.xpose.msra.mxu0 0.0
        %1144 = vmatprep.mubr.f32.mxu0 0.0
        %1145 = vmatmul.mubr.f32.gmra.mrb[0].mxu0 %v1076
        %v1146 = vpop.f32.mrb[0].mxu0
        %v1147 = vadd.f32 0.0, %v1146
        %v1148 = vpop.f32.mrb[0].mxu0
        %1149 = vdwg.mxu0
        %v1150 = vsel %vm743, %v1147, -inf
        %1151 = vmax.xlane.f32.xlu0 %v1150
        %v1152 = vpop.xlane.xlu0 %1151
        %v1153 = vsub.f32 %v1147, %v1152
        %v1154 = vmul.f32 %v1153, 1.442695
        %v1155 = vpow.pop %v1154
        %v1156 = vsel %vm743, %v1155, 0.0
        %1157 = vadd.xlane.f32.xlu0 %v1156
        %v1158 = vpop.xlane.xlu0 %1157
        %1159 = vrot.lane.b32.xlu0 %v739, 112
        %v1160 = vpop.permute.xlu0 %1159
        %v1163 = vsel %vm743, %v1155, 0
        %1165 = vmatprep.subr.mxu0 0.0
        %1166 = vmatpush1.msra.mxu0 %v1160
        %1167 = vmatprep.subr.mxu0 0.0
        %1168 = vmatpush1.msra.mxu0 0.0
        %1169 = vmatprep.subr.mxu0 0.0
        %1170 = vmatpush1.msra.mxu0 0.0
        %1171 = vmatprep.subr.mxu0 0.0
        %1172 = vmatpush1.msra.mxu0 0.0
        %1173 = vmatprep.subr.mxu0 0.0
        %1174 = vmatpush1.msra.mxu0 0.0
        %1175 = vmatprep.subr.mxu0 0.0
        %1176 = vmatpush1.msra.mxu0 0.0
        %1177 = vmatprep.subr.mxu0 0.0
        %1178 = vmatpush1.msra.mxu0 0.0
        %1179 = vmatprep.subr.mxu0 0.0
        %1180 = vmatpush1.msra.mxu0 0.0
        %1181 = vmatprep.subr.mxu0 0.0
        %1182 = vmatpush1.msra.mxu0 0.0
        %1183 = vmatprep.subr.mxu0 0.0
        %1184 = vmatpush1.msra.mxu0 0.0
        %1185 = vmatprep.subr.mxu0 0.0
        %1186 = vmatpush1.msra.mxu0 0.0
        %1187 = vmatprep.subr.mxu0 0.0
        %1188 = vmatpush1.msra.mxu0 0.0
        %1189 = vmatprep.subr.mxu0 0.0
        %1190 = vmatpush1.msra.mxu0 0.0
        %1191 = vmatprep.subr.mxu0 0.0
        %1192 = vmatpush1.msra.mxu0 0.0
        %1193 = vmatprep.subr.mxu0 0.0
        %1194 = vmatpush1.msra.mxu0 0.0
        %1195 = vmatprep.subr.mxu0 0.0
        %1196 = vmatpush1.msra.mxu0 0.0
        %1197 = vmatprep.subr.mxu0 0.0
        %1198 = vmatpush1.msra.mxu0 0.0
        %1199 = vmatprep.subr.mxu0 0.0
        %1200 = vmatpush1.msra.mxu0 0.0
        %1201 = vmatprep.subr.mxu0 0.0
        %1202 = vmatpush1.msra.mxu0 0.0
        %1203 = vmatprep.subr.mxu0 0.0
        %1204 = vmatpush1.msra.mxu0 0.0
        %1205 = vmatprep.subr.mxu0 0.0
        %1206 = vmatpush1.msra.mxu0 0.0
        %1207 = vmatprep.subr.mxu0 0.0
        %1208 = vmatpush1.msra.mxu0 0.0
        %1209 = vmatprep.subr.mxu0 0.0
        %1210 = vmatpush1.msra.mxu0 0.0
        %1211 = vmatprep.subr.mxu0 0.0
        %1212 = vmatpush1.msra.mxu0 0.0
        %1213 = vmatprep.subr.mxu0 0.0
        %1214 = vmatpush1.msra.mxu0 0.0
        %1215 = vmatprep.subr.mxu0 0.0
        %1216 = vmatpush1.msra.mxu0 0.0
        %1217 = vmatprep.subr.mxu0 0.0
        %1218 = vmatpush1.msra.mxu0 0.0
        %1219 = vmatprep.subr.mxu0 0.0
        %1220 = vmatpush1.msra.mxu0 0.0
        %1221 = vmatprep.subr.mxu0 0.0
        %1222 = vmatpush1.msra.mxu0 0.0
        %1223 = vmatprep.subr.mxu0 0.0
        %1224 = vmatpush1.msra.mxu0 0.0
        %1225 = vmatprep.subr.mxu0 0.0
        %1226 = vmatpush1.msra.mxu0 0.0
        %1227 = vmatprep.subr.mxu0 0.0
        %1228 = vmatpush1.msra.mxu0 0.0
        %1229 = vmatprep.mubr.f32.mxu0 0.0
        %1230 = vmatmul.mubr.f32.gmra.mrb[0].mxu0 %v1163
        %v1231 = vpop.f32.mrb[0].mxu0
        %v1232 = vadd.f32 0.0, %v1231
        %v1233 = vpop.f32.mrb[0].mxu0
        %1234 = vdwg.mxu0
        %v1235 = vrcp.pop %v1158
        %v1236 = vmul.f32 1.0, %v1235
        %v1237 = vmul.f32 %v1232, %v1236
        %1238 = vrot.lane.b32.xlu0 %v742, 104
        %v1239 = vpop.permute.xlu0 %1238
        %1240 = vrot.lane.b32.xlu0 %v660, 104
        %v1241 = vpop.permute.xlu0 %1240
        %v1242 = vsel %vm743, %v1239, 0
        %v1244 = vsel %vm743, %v1241, 0
        %1246 = vmatprep.subr.mxu0 0.0
        %1247 = vmatpush1.xpose.msra.mxu0 %v1244
        %1248 = vmatprep.subr.mxu0 0.0
        %1249 = vmatpush1.xpose.msra.mxu0 0.0
        %1250 = vmatprep.subr.mxu0 0.0
        %1251 = vmatpush1.xpose.msra.mxu0 0.0
        %1252 = vmatprep.subr.mxu0 0.0
        %1253 = vmatpush1.xpose.msra.mxu0 0.0
        %1254 = vmatprep.subr.mxu0 0.0
        %1255 = vmatpush1.xpose.msra.mxu0 0.0
        %1256 = vmatprep.subr.mxu0 0.0
        %1257 = vmatpush1.xpose.msra.mxu0 0.0
        %1258 = vmatprep.subr.mxu0 0.0
        %1259 = vmatpush1.xpose.msra.mxu0 0.0
        %1260 = vmatprep.subr.mxu0 0.0
        %1261 = vmatpush1.xpose.msra.mxu0 0.0
        %1262 = vmatprep.subr.mxu0 0.0
        %1263 = vmatpush1.xpose.msra.mxu0 0.0
        %1264 = vmatprep.subr.mxu0 0.0
        %1265 = vmatpush1.xpose.msra.mxu0 0.0
        %1266 = vmatprep.subr.mxu0 0.0
        %1267 = vmatpush1.xpose.msra.mxu0 0.0
        %1268 = vmatprep.subr.mxu0 0.0
        %1269 = vmatpush1.xpose.msra.mxu0 0.0
        %1270 = vmatprep.subr.mxu0 0.0
        %1271 = vmatpush1.xpose.msra.mxu0 0.0
        %1272 = vmatprep.subr.mxu0 0.0
        %1273 = vmatpush1.xpose.msra.mxu0 0.0
        %1274 = vmatprep.subr.mxu0 0.0
        %1275 = vmatpush1.xpose.msra.mxu0 0.0
        %1276 = vmatprep.subr.mxu0 0.0
        %1277 = vmatpush1.xpose.msra.mxu0 0.0
        %1278 = vmatprep.subr.mxu0 0.0
        %1279 = vmatpush1.xpose.msra.mxu0 0.0
        %1280 = vmatprep.subr.mxu0 0.0
        %1281 = vmatpush1.xpose.msra.mxu0 0.0
        %1282 = vmatprep.subr.mxu0 0.0
        %1283 = vmatpush1.xpose.msra.mxu0 0.0
        %1284 = vmatprep.subr.mxu0 0.0
        %1285 = vmatpush1.xpose.msra.mxu0 0.0
        %1286 = vmatprep.subr.mxu0 0.0
        %1287 = vmatpush1.xpose.msra.mxu0 0.0
        %1288 = vmatprep.subr.mxu0 0.0
        %1289 = vmatpush1.xpose.msra.mxu0 0.0
        %1290 = vmatprep.subr.mxu0 0.0
        %1291 = vmatpush1.xpose.msra.mxu0 0.0
        %1292 = vmatprep.subr.mxu0 0.0
        %1293 = vmatpush1.xpose.msra.mxu0 0.0
        %1294 = vmatprep.subr.mxu0 0.0
        %1295 = vmatpush1.xpose.msra.mxu0 0.0
        %1296 = vmatprep.subr.mxu0 0.0
        %1297 = vmatpush1.xpose.msra.mxu0 0.0
        %1298 = vmatprep.subr.mxu0 0.0
        %1299 = vmatpush1.xpose.msra.mxu0 0.0
        %1300 = vmatprep.subr.mxu0 0.0
        %1301 = vmatpush1.xpose.msra.mxu0 0.0
        %1302 = vmatprep.subr.mxu0 0.0
        %1303 = vmatpush1.xpose.msra.mxu0 0.0
        %1304 = vmatprep.subr.mxu0 0.0
        %1305 = vmatpush1.xpose.msra.mxu0 0.0
        %1306 = vmatprep.subr.mxu0 0.0
        %1307 = vmatpush1.xpose.msra.mxu0 0.0
        %1308 = vmatprep.subr.mxu0 0.0
        %1309 = vmatpush1.xpose.msra.mxu0 0.0
        %1310 = vmatprep.mubr.f32.mxu0 0.0
        %1311 = vmatmul.mubr.f32.gmra.mrb[0].mxu0 %v1242
        %v1312 = vpop.f32.mrb[0].mxu0
        %v1313 = vadd.f32 0.0, %v1312
        %v1314 = vpop.f32.mrb[0].mxu0
        %1315 = vdwg.mxu0
        %v1316 = vsel %vm743, %v1313, -inf
        %1317 = vmax.xlane.f32.xlu0 %v1316
        %v1318 = vpop.xlane.xlu0 %1317
        %v1319 = vsub.f32 %v1313, %v1318
        %v1320 = vmul.f32 %v1319, 1.442695
        %v1321 = vpow.pop %v1320
        %v1322 = vsel %vm743, %v1321, 0.0
        %1323 = vadd.xlane.f32.xlu0 %v1322
        %v1324 = vpop.xlane.xlu0 %1323
        %1325 = vrot.lane.b32.xlu0 %v739, 104
        %v1326 = vpop.permute.xlu0 %1325
        %v1329 = vsel %vm743, %v1321, 0
        %1331 = vmatprep.subr.mxu0 0.0
        %1332 = vmatpush1.msra.mxu0 %v1326
        %1333 = vmatprep.subr.mxu0 0.0
        %1334 = vmatpush1.msra.mxu0 0.0
        %1335 = vmatprep.subr.mxu0 0.0
        %1336 = vmatpush1.msra.mxu0 0.0
        %1337 = vmatprep.subr.mxu0 0.0
        %1338 = vmatpush1.msra.mxu0 0.0
        %1339 = vmatprep.subr.mxu0 0.0
        %1340 = vmatpush1.msra.mxu0 0.0
        %1341 = vmatprep.subr.mxu0 0.0
        %1342 = vmatpush1.msra.mxu0 0.0
        %1343 = vmatprep.subr.mxu0 0.0
        %1344 = vmatpush1.msra.mxu0 0.0
        %1345 = vmatprep.subr.mxu0 0.0
        %1346 = vmatpush1.msra.mxu0 0.0
        %1347 = vmatprep.subr.mxu0 0.0
        %1348 = vmatpush1.msra.mxu0 0.0
        %1349 = vmatprep.subr.mxu0 0.0
        %1350 = vmatpush1.msra.mxu0 0.0
        %1351 = vmatprep.subr.mxu0 0.0
        %1352 = vmatpush1.msra.mxu0 0.0
        %1353 = vmatprep.subr.mxu0 0.0
        %1354 = vmatpush1.msra.mxu0 0.0
        %1355 = vmatprep.subr.mxu0 0.0
        %1356 = vmatpush1.msra.mxu0 0.0
        %1357 = vmatprep.subr.mxu0 0.0
        %1358 = vmatpush1.msra.mxu0 0.0
        %1359 = vmatprep.subr.mxu0 0.0
        %1360 = vmatpush1.msra.mxu0 0.0
        %1361 = vmatprep.subr.mxu0 0.0
        %1362 = vmatpush1.msra.mxu0 0.0
        %1363 = vmatprep.subr.mxu0 0.0
        %1364 = vmatpush1.msra.mxu0 0.0
        %1365 = vmatprep.subr.mxu0 0.0
        %1366 = vmatpush1.msra.mxu0 0.0
        %1367 = vmatprep.subr.mxu0 0.0
        %1368 = vmatpush1.msra.mxu0 0.0
        %1369 = vmatprep.subr.mxu0 0.0
        %1370 = vmatpush1.msra.mxu0 0.0
        %1371 = vmatprep.subr.mxu0 0.0
        %1372 = vmatpush1.msra.mxu0 0.0
        %1373 = vmatprep.subr.mxu0 0.0
        %1374 = vmatpush1.msra.mxu0 0.0
        %1375 = vmatprep.subr.mxu0 0.0
        %1376 = vmatpush1.msra.mxu0 0.0
        %1377 = vmatprep.subr.mxu0 0.0
        %1378 = vmatpush1.msra.mxu0 0.0
        %1379 = vmatprep.subr.mxu0 0.0
        %1380 = vmatpush1.msra.mxu0 0.0
        %1381 = vmatprep.subr.mxu0 0.0
        %1382 = vmatpush1.msra.mxu0 0.0
        %1383 = vmatprep.subr.mxu0 0.0
        %1384 = vmatpush1.msra.mxu0 0.0
        %1385 = vmatprep.subr.mxu0 0.0
        %1386 = vmatpush1.msra.mxu0 0.0
        %1387 = vmatprep.subr.mxu0 0.0
        %1388 = vmatpush1.msra.mxu0 0.0
        %1389 = vmatprep.subr.mxu0 0.0
        %1390 = vmatpush1.msra.mxu0 0.0
        %1391 = vmatprep.subr.mxu0 0.0
        %1392 = vmatpush1.msra.mxu0 0.0
        %1393 = vmatprep.subr.mxu0 0.0
        %1394 = vmatpush1.msra.mxu0 0.0
        %1395 = vmatprep.mubr.f32.mxu0 0.0
        %1396 = vmatmul.mubr.f32.gmra.mrb[0].mxu0 %v1329
        %v1397 = vpop.f32.mrb[0].mxu0
        %v1398 = vadd.f32 0.0, %v1397
        %v1399 = vpop.f32.mrb[0].mxu0
        %1400 = vdwg.mxu0
        %v1401 = vrcp.pop %v1324
        %v1402 = vmul.f32 1.0, %v1401
        %v1403 = vmul.f32 %v1398, %v1402
        %1405 = vrot.lane.b32.xlu0 %v1071, 8
        %v1406 = vpop.permute.xlu0 %1405
        %1409 = vrot.lane.b32.xlu0 %v1237, 16
        %v1410 = vpop.permute.xlu0 %1409
        %1413 = vrot.lane.b32.xlu0 %v1403, 24
        %v1414 = vpop.permute.xlu0 %1413
        %v1416 = vsel %vm743, %v904, %v1406
        %v1417 = vsel %vm510, %v1416, %v1410
        %vm1418 = vcmask 195584
        %v1419 = vsel %vm1418, %v1417, %v1414
        %v1420 = vadd.f32 %v581, %v1419
        %v1421 = vld [vmem:[#allocation8] sm:$0xff]
        %v1422 = vld [vmem:[#allocation8 + $0x8] sm:$0xff]
        %v1423 = vld [vmem:[#allocation8 + $0x10] sm:$0xff]
        %v1424 = vld [vmem:[#allocation8 + $0x18] sm:$0xff]
        %v1425 = vld [vmem:[%s8] sm:$0x1]
        %v1427 = vlaneseq
        %v1428 = vshrl.u32 %v1427, 7
        %v1429 = vsub.s32 0, %v1428
        %v1430 = vrot.slane %v1425, %v1429
        %vm1432 = vcmask 261120
        %v1434 = vsel %vm1432, %v1420, 0
        %1436 = vmatprep.subr.mxu0 0.0
        %1437 = vmatpush1.msra.mxu0 %v1421
        %1438 = vmatprep.subr.mxu0 0.0
        %1439 = vmatpush1.msra.mxu0 %v1422
        %1440 = vmatprep.subr.mxu0 0.0
        %1441 = vmatpush1.msra.mxu0 %v1423
        %1442 = vmatprep.subr.mxu0 0.0
        %1443 = vmatpush1.msra.mxu0 %v1424
        %1444 = vmatprep.subr.mxu0 0.0
        %1445 = vmatpush1.msra.mxu0 0.0
        %1446 = vmatprep.subr.mxu0 0.0
        %1447 = vmatpush1.msra.mxu0 0.0
        %1448 = vmatprep.subr.mxu0 0.0
        %1449 = vmatpush1.msra.mxu0 0.0
        %1450 = vmatprep.subr.mxu0 0.0
        %1451 = vmatpush1.msra.mxu0 0.0
        %1452 = vmatprep.subr.mxu0 0.0
        %1453 = vmatpush1.msra.mxu0 0.0
        %1454 = vmatprep.subr.mxu0 0.0
        %1455 = vmatpush1.msra.mxu0 0.0
        %1456 = vmatprep.subr.mxu0 0.0
        %1457 = vmatpush1.msra.mxu0 0.0
        %1458 = vmatprep.subr.mxu0 0.0
        %1459 = vmatpush1.msra.mxu0 0.0
        %1460 = vmatprep.subr.mxu0 0.0
        %1461 = vmatpush1.msra.mxu0 0.0
        %1462 = vmatprep.subr.mxu0 0.0
        %1463 = vmatpush1.msra.mxu0 0.0
        %1464 = vmatprep.subr.mxu0 0.0
        %1465 = vmatpush1.msra.mxu0 0.0
        %1466 = vmatprep.subr.mxu0 0.0
        %1467 = vmatpush1.msra.mxu0 0.0
        %1468 = vmatprep.subr.mxu0 0.0
        %1469 = vmatpush1.msra.mxu0 0.0
        %1470 = vmatprep.subr.mxu0 0.0
        %1471 = vmatpush1.msra.mxu0 0.0
        %1472 = vmatprep.subr.mxu0 0.0
        %1473 = vmatpush1.msra.mxu0 0.0
        %1474 = vmatprep.subr.mxu0 0.0
        %1475 = vmatpush1.msra.mxu0 0.0
        %1476 = vmatprep.subr.mxu0 0.0
        %1477 = vmatpush1.msra.mxu0 0.0
        %1478 = vmatprep.subr.mxu0 0.0
        %1479 = vmatpush1.msra.mxu0 0.0
        %1480 = vmatprep.subr.mxu0 0.0
        %1481 = vmatpush1.msra.mxu0 0.0
        %1482 = vmatprep.subr.mxu0 0.0
        %1483 = vmatpush1.msra.mxu0 0.0
        %1484 = vmatprep.subr.mxu0 0.0
        %1485 = vmatpush1.msra.mxu0 0.0
        %1486 = vmatprep.subr.mxu0 0.0
        %1487 = vmatpush1.msra.mxu0 0.0
        %1488 = vmatprep.subr.mxu0 0.0
        %1489 = vmatpush1.msra.mxu0 0.0
        %1490 = vmatprep.subr.mxu0 0.0
        %1491 = vmatpush1.msra.mxu0 0.0
        %1492 = vmatprep.subr.mxu0 0.0
        %1493 = vmatpush1.msra.mxu0 0.0
        %1494 = vmatprep.subr.mxu0 0.0
        %1495 = vmatpush1.msra.mxu0 0.0
        %1496 = vmatprep.subr.mxu0 0.0
        %1497 = vmatpush1.msra.mxu0 0.0
        %1498 = vmatprep.subr.mxu0 0.0
        %1499 = vmatpush1.msra.mxu0 0.0
        %1500 = vmatprep.mubr.f32.mxu0 0.0
        %1501 = vmatmul.mubr.f32.gmra.mrb[0].mxu0 %v1434
        %v1502 = vpop.f32.mrb[0].mxu0
        %v1503 = vadd.f32 %v1430, %v1502
        %v1504 = vpop.f32.mrb[0].mxu0
        %1505 = vdwg.mxu0
        %v1506 = vmax.f32 %v1503, 0.0
        %v1507 = vadd.f32 %v1420, %v1506
        %1508 = vst.msk [vmem:[%s499] sm:$0xff] %vm1432, %v1507
        %s1509 = sand.u32 %s318, 1
        %s1510 = scalar_lea.sflag [#allocation4], %s1509
        %s1511 = sand.u32 %s318, 1
        %s1512 = smul.addr %s1511, 8
        %s1513 = scalar_lea.vmem [#allocation10], %s1512
        // Predicated region
        $region89: #{tpu_custom_call.1} parent=71 // pred_check
          %p1514 = pneg %p328
        $region90: #{tpu_custom_call.1} parent=71 // pred_check_branch
          %1516 = sbr.rel (%p1514) target = $region92
        $region91: #{tpu_custom_call.1} parent=71 // pred_region
          %s1518 = ssub.s32 128, 128
          %1519 = vsyncadd %s1510, %s1518
          %s1520 = smul.addr %s32, 128
          %s1521 = scalar_lea.hbm %s13, %s1520
          %s1523 = sshll.u32 %s1513, 4
          %s1524 = int_to_ptr.vmem [resolvable:$true] %s1523
          %1526 = dma.vmem_to_hbm [thread:$0]  %s1524, 128, %s1521, %s1510
        $region92: #{tpu_custom_call.1} parent=71 // pred_fallthru
          _
      $region72: #{tpu_custom_call.1} parent=5 // pred_fallthru
        _
      %p1527 = scmp.le.s32.totalorder 2, %s27
      // Predicated region
      $region93: #{tpu_custom_call.1} parent=5 // pred_check
        %p1528 = pneg %p1527
      $region94: #{tpu_custom_call.1} parent=5 // pred_check_branch
        %1530 = sbr.rel (%p1528) target = $region96
      $region95: #{tpu_custom_call.1} parent=5 // pred_region
        %s1531 = ssub.s32 %s27, 2
        // Predicated region
        $region97: #{tpu_custom_call.1} parent=95 // pred_check
          %p1532 = pneg %p334
        $region98: #{tpu_custom_call.1} parent=95 // pred_check_branch
          %1534 = sbr.rel (%p1532) target = $region100
        $region99: #{tpu_custom_call.1} parent=95 // pred_region
          %s1535 = sand.u32 %s319, 1
          %s1536 = scalar_lea.sflag [#allocation4], %s1535
          %s1537 = sand.u32 %s319, 1
          %s1538 = smul.addr %s1537, 8
          %s1539 = scalar_lea.vmem [#allocation10], %s1538
          %1540 = dma.done %s1536, 128
        $region100: #{tpu_custom_call.1} parent=95 // pred_fallthru
          _
      $region96: #{tpu_custom_call.1} parent=5 // pred_fallthru
        _
    $region6: #{tpu_custom_call.1} parent=1 // loop_footer
      %s31 = sadd.s32 1, %s27
    $region7: #{tpu_custom_call.1} parent=1 // loop_footer_branch
      %26 = sbr.rel target = $region3
    $region8: #{tpu_custom_call.1} parent=1 // loop_exit
      _
    %1541 = vsyncpa [#allocation3], 1
    %s1542 = scalar_lea.sflag [#allocation3], 1
    %1543 = vsyncpa %s1542, 1
    %1544 = vsyncpa [#allocation6], 1
    %1545 = vsyncpa [#allocation9], 1
    %1546 = vsyncpa [#allocation4], 1
    %s1547 = scalar_lea.sflag [#allocation4], 1
    %1548 = vsyncpa %s1547, 1

</llo_original>
